<compile_context>
chip_gen: v7x
topology: tpu7x:2x2x1
jax: 0.10.0
libtpu: 0.0.40
codegen_flags: <defaults>
</compile_context>

<pallas_src>
import functools

import jax
import jax.numpy as jnp
from jax import lax
from jax.experimental import pallas as pl
from jax.experimental.pallas import tpu as pltpu

_SUBLANE_PACK_BF16 = 16   # bf16 native tiling is (16, 128)


def _round_up(x, m):
    return ((x + m - 1) // m) * m


def _sigmoid(x):
    # One EUP push (tanh) instead of exp + divide.
    return 0.5 * jnp.tanh(0.5 * x) + 0.5


def _convlstm_kernel(x_ref, h_ref, c_ref, w_ref, h_out_ref, c_out_ref,
                     xh_ref, patch_ref, *, kh, kw, width, lane_pad, cin, ch):
    # x_ref:     (1, Cin, HW)            this batch element's input
    # h_ref:     (1, Ch,  HW)            previous hidden state
    # c_ref:     (1, Ch,  HW)            previous cell state
    # w_ref:     (4*Ch, KH*KW*C_pad)     bf16 im2col weights (+bias column)
    # h_out_ref, c_out_ref: (1, Ch, HW)
    # xh_ref:    VMEM (C_pad, HW + 2*lane_pad) bf16   padded [x; h; ones; 0]
    # patch_ref: VMEM (KH*KW*C_pad, HW)        bf16   im2col matrix
    HW = c_ref.shape[2]
    C_pad = xh_ref.shape[0]
    C = cin + ch
    W = width
    cy, cx = (kh - 1) // 2, (kw - 1) // 2

    # ---- assemble lane-padded [x; h; ones(bias); zero-pad] in VMEM ---------
    # Re-initialised every grid step: with "parallel" semantics each
    # TensorCore owns a subset of the grid and has its own scratch, so no
    # state may be carried across steps.
    xh_ref[...] = jnp.zeros_like(xh_ref)
    xh_ref[0:cin, lane_pad:lane_pad + HW] = x_ref[0].astype(xh_ref.dtype)
    xh_ref[cin:C, lane_pad:lane_pad + HW] = h_ref[0].astype(xh_ref.dtype)
    xh_ref[C:C + 1, lane_pad:lane_pad + HW] = jnp.ones((1, HW), xh_ref.dtype)

    # ---- im2col: (kh*kw*C_pad, HW) bf16 patch matrix ------------------------
    # Horizontal-boundary masks hoisted out of the tap loops (one compare per
    # distinct dx).  Vertical taps need no mask: the zero lane border of
    # xh_ref supplies the conv's zero padding for +-W shifts.
    col = lax.broadcasted_iota(jnp.int32, (C_pad, HW), 1) % W
    masks = {}
    for kx in range(kw):
        dx = kx - cx
        if dx > 0:
            masks[dx] = col < (W - dx)
        elif dx < 0:
            masks[dx] = col >= (-dx)

    for ky in range(kh):
        for kx in range(kw):
            dy, dx = ky - cy, kx - cx
            start = lane_pad + dy * W + dx
            win = xh_ref[:, start:start + HW]          # constant-offset window
            if dx != 0:
                win = jnp.where(masks[dx], win, jnp.zeros_like(win))
            t = ky * kw + kx
            # C_pad is a multiple of 16, so these bf16 stores are
            # sublane-aligned, full-width, unmasked.
            patch_ref[t * C_pad:(t + 1) * C_pad, :] = win

    # ---- gates (bf16 MXU, f32 acc) fused with the state update, per chunk --
    # Chunking the lane axis keeps the live vreg set small (no spill) and
    # lets MXU, EUP, VALU and the output stores overlap across chunks.
    chunk = 128 if HW % 128 == 0 else HW
    for off in range(0, HW, chunk):
        g = jnp.dot(w_ref[...], patch_ref[:, off:off + chunk],
                    preferred_element_type=jnp.float32)   # (4*Ch, chunk) f32
        i_g = _sigmoid(g[0 * ch:1 * ch])
        f_g = _sigmoid(g[1 * ch:2 * ch])
        o_g = _sigmoid(g[2 * ch:3 * ch])
        g_u = jnp.tanh(g[3 * ch:4 * ch])

        c_prev = c_ref[0, :, off:off + chunk].astype(jnp.float32)
        c_new = f_g * c_prev + i_g * g_u
        h_new = o_g * jnp.tanh(c_new)

        # Lane-dense, 128-aligned output stores (unmasked vst).
        c_out_ref[0, :, off:off + chunk] = c_new.astype(c_out_ref.dtype)
        h_out_ref[0, :, off:off + chunk] = h_new.astype(h_out_ref.dtype)


def prepare_conv_lstm_weights(weight_oihw, bias):
    """One-time weight prep (hoist out of the per-timestep path).

    OIHW conv weights (4*Ch, Cin+Ch, KH, KW) + bias (4*Ch,) -> flattened bf16
    im2col weights of shape (4*Ch, KH*KW*C_pad).

    Per-tap channel layout: [Cin x-channels, Ch h-channels, 1 constant-ones
    bias channel, zero pad up to C_pad].  The bias is folded into the
    center-tap column of the ones channel.
    INVARIANT: every non-center-tap column of the ones channel and every
    column of the zero-pad channels must stay exactly zero (guaranteed by the
    jnp.pad below) — the in-kernel bias fold relies on it.
    """
    O, C, KH, KW = weight_oihw.shape
    C_pad = _round_up(C + 1, _SUBLANE_PACK_BF16)      # +1 for the bias channel
    w_t = jnp.transpose(weight_oihw, (0, 2, 3, 1)).astype(jnp.float32)  # O,KH,KW,C
    w_t = jnp.pad(w_t, ((0, 0), (0, 0), (0, 0), (0, C_pad - C)))
    w_t = w_t.at[:, (KH - 1) // 2, (KW - 1) // 2, C].set(
        bias.astype(jnp.float32))                      # bias -> center tap
    return w_t.reshape(O, KH * KW * C_pad).astype(jnp.bfloat16)


@functools.partial(jax.jit, static_argnames=("kh", "kw"))
def conv_lstm_cell(x_nchw, w_flat, hidden=None, cell_state=None, *, kh=3, kw=3):
    """Pallas ConvLSTMCell forward (stride 1, 'same' padding = (k-1)//2).

    x_nchw : (B, Cin, H, W), NCHW like PyTorch (f32 or bf16).
    w_flat : output of prepare_conv_lstm_weights(), computed once and reused
             every timestep.
    Returns (hidden, cell_state), each (B, Ch, H, W) in x's dtype.
    """
    B, Cin, H, W = x_nchw.shape
    O, K = w_flat.shape
    Ch = O // 4
    C_pad = K // (kh * kw)
    HW = H * W
    out_dtype = x_nchw.dtype

    if hidden is None:
        hidden = jnp.zeros((B, Ch, H, W), out_dtype)
    if cell_state is None:
        cell_state = jnp.zeros((B, Ch, H, W), out_dtype)

    # Wrapper does reshapes only — NCHW already matches the lane-dense
    # compute layout (channels on sublanes, flattened H*W on lanes).
    x_r = x_nchw.reshape(B, Cin, HW)
    h_r = hidden.reshape(B, Ch, HW)
    c_r = cell_state.reshape(B, Ch, HW)

    # Lane-aligned zero border around the flattened spatial axis, big enough
    # for the largest tap shift.  Kept a multiple of 128 so the in-kernel
    # assembly stores are lane-aligned; the buffer lives in VMEM, so the pad
    # itself costs no HBM traffic.
    cy, cx = (kh - 1) // 2, (kw - 1) // 2
    max_shift = max(cy * W + cx, (kh - 1 - cy) * W + (kw - 1 - cx), 1)
    lane_pad = _round_up(max_shift, 128)
    HW_ext = HW + 2 * lane_pad

    kernel = functools.partial(_convlstm_kernel, kh=kh, kw=kw, width=W,
                               lane_pad=lane_pad, cin=Cin, ch=Ch)

    h_out, c_out = pl.pallas_call(
        kernel,
        out_shape=(
            jax.ShapeDtypeStruct((B, Ch, HW), out_dtype),
            jax.ShapeDtypeStruct((B, Ch, HW), out_dtype),
        ),
        grid_spec=pltpu.PrefetchScalarGridSpec(
            num_scalar_prefetch=0,
            grid=(B,),                          # one batch element per step
            in_specs=[
                pl.BlockSpec((1, Cin, HW), lambda b: (b, 0, 0)),
                pl.BlockSpec((1, Ch, HW), lambda b: (b, 0, 0)),
                pl.BlockSpec((1, Ch, HW), lambda b: (b, 0, 0)),
                pl.BlockSpec((O, K), lambda b: (0, 0)),   # weights resident
            ],
            out_specs=[
                pl.BlockSpec((1, Ch, HW), lambda b: (b, 0, 0)),
                pl.BlockSpec((1, Ch, HW), lambda b: (b, 0, 0)),
            ],
            scratch_shapes=[
                pltpu.VMEM((C_pad, HW_ext), jnp.bfloat16),   # padded [x;h;1;0]
                pltpu.VMEM((K, HW), jnp.bfloat16),           # im2col patches
            ],
        ),
        compiler_params=pltpu.CompilerParams(
            # Batch steps are independent: pipelined (DMA/compute overlap) on
            # 1-TC chips, shared across both TensorCores on v7x.
            dimension_semantics=("parallel",)),
    )(x_r, h_r, c_r, w_flat)

    # Free reshape back to NCHW.
    return h_out.reshape(B, Ch, H, W), c_out.reshape(B, Ch, H, W)


def _reference(x, w, b, Ch, hidden=None, cell_state=None):
    """Plain-JAX reference mirroring the PyTorch forward (NCHW)."""
    B, _, H, W = x.shape
    if hidden is None:
        hidden = jnp.zeros((B, Ch, H, W), x.dtype)
    if cell_state is None:
        cell_state = jnp.zeros((B, Ch, H, W), x.dtype)
    xh = jnp.concatenate([x, hidden], axis=1)
    kh, kw = w.shape[2], w.shape[3]
    pad = ((kh - 1) // 2, (kh - 1) // 2), ((kw - 1) // 2, (kw - 1) // 2)
    gates = lax.conv_general_dilated(
        xh, w, window_strides=(1, 1), padding=pad,
        dimension_numbers=("NCHW", "OIHW", "NCHW"))
    gates = gates + b.reshape(1, -1, 1, 1)
    i_g, f_g, o_g, g = jnp.split(gates, 4, axis=1)
    i_g, f_g, o_g = jax.nn.sigmoid(i_g), jax.nn.sigmoid(f_g), jax.nn.sigmoid(o_g)
    g = jnp.tanh(g)
    c_new = f_g * cell_state + i_g * g
    h_new = o_g * jnp.tanh(c_new)
    return h_new, c_new


if __name__ == "__main__":
    # Small shapes consistent with the module.
    B, Cin, H, W = 2, 4, 16, 16
    Ch = 32                       # hidden_channels
    K = 3                         # kernel_size, padding = (K-1)//2 = 1

    key = jax.random.PRNGKey(0)
    k_x, k_w, k_b, k_h, k_c = jax.random.split(key, 5)

    x = jax.random.normal(k_x, (B, Cin, H, W), jnp.float32)

    # Deterministic parameter init (PyTorch Conv2d-style uniform fan-in bound).
    fan_in = (Cin + Ch) * K * K
    bound = 1.0 / (fan_in ** 0.5)
    weight = jax.random.uniform(k_w, (4 * Ch, Cin + Ch, K, K), jnp.float32,
                                -bound, bound)   # OIHW, like PyTorch
    bias = jax.random.uniform(k_b, (4 * Ch,), jnp.float32, -bound, bound)

    # Nonzero previous state to exercise the recurrence path too.
    h0 = jax.random.normal(k_h, (B, Ch, H, W), jnp.float32) * 0.1
    c0 = jax.random.normal(k_c, (B, Ch, H, W), jnp.float32) * 0.1

    # One-time weight prep, hoisted out of the per-timestep call.
    w_flat = prepare_conv_lstm_weights(weight, bias)
    jax.block_until_ready(w_flat)

    h_new, c_new = conv_lstm_cell(x, w_flat, h0, c0)
    jax.block_until_ready((h_new, c_new))

    # Also check the default (hidden=None) path once.
    h_def, c_def = conv_lstm_cell(x, w_flat)
    jax.block_until_ready((h_def, c_def))

    h_ref, c_ref = _reference(x, weight, bias, Ch, h0, c0)
    h_ref0, c_ref0 = _reference(x, weight, bias, Ch)

    # bf16 MXU inputs with f32 accumulation -> loosened tolerance vs the
    # all-f32 reference.
    tol = dict(atol=2e-2, rtol=2e-2)
    assert jnp.allclose(h_new, h_ref, **tol)
    assert jnp.allclose(c_new, c_ref, **tol)
    assert jnp.allclose(h_def, h_ref0, **tol)
    assert jnp.allclose(c_def, c_ref0, **tol)

    print("KERNEL_OK")
</pallas_src>

<mosaic_0001>
module attributes {stable_mosaic.version = 11 : i64} {
  func.func @_convlstm_kernel(%arg0: i32, %arg1: memref<1x4x256xf32, #tpu.memory_space<vmem>>, %arg2: memref<1x32x256xf32, #tpu.memory_space<vmem>>, %arg3: memref<1x32x256xf32, #tpu.memory_space<vmem>>, %arg4: memref<128x432xbf16, #tpu.memory_space<vmem>>, %arg5: memref<1x32x256xf32, #tpu.memory_space<vmem>>, %arg6: memref<1x32x256xf32, #tpu.memory_space<vmem>>, %arg7: memref<48x512xbf16, #tpu.memory_space<vmem>>, %arg8: memref<432x256xbf16, #tpu.memory_space<vmem>>) attributes {dimension_semantics = [#tpu.dimension_semantics<parallel>], iteration_bounds = array<i64: 2>, scalar_prefetch = 0 : i64, scratch_operands = 2 : i64, tpu.core_type = #tpu.core_type<tc>, window_params = [{transform_indices = @transform_0, window_bounds = array<i64: 1, 4, 256>}, {transform_indices = @transform_1, window_bounds = array<i64: 1, 32, 256>}, {transform_indices = @transform_2, window_bounds = array<i64: 1, 32, 256>}, {pipeline_mode = #tpu.pipeline_mode<synchronous>, transform_indices = @transform_3, window_bounds = array<i64: 128, 432>}, {transform_indices = @transform_4, window_bounds = array<i64: 1, 32, 256>}, {transform_indices = @transform_5, window_bounds = array<i64: 1, 32, 256>}]} {
    %cst = arith.constant 0.000000e+00 : bf16
    %0 = vector.broadcast %cst : bf16 to vector<48x512xbf16>
    %c0 = arith.constant 0 : index
    %c0_0 = arith.constant 0 : index
    %1 = vector.load %arg7[%c0, %c0_0] : memref<48x512xbf16, #tpu.memory_space<vmem>>, vector<48x512xbf16>
    tpu.vector_store %arg7[%c0, %c0_0], %0 {strides = array<i32>} : memref<48x512xbf16, #tpu.memory_space<vmem>>, vector<48x512xbf16>,
    %c0_1 = arith.constant 0 : index
    %c0_2 = arith.constant 0 : index
    %c0_3 = arith.constant 0 : index
    %2 = vector.load %arg1[%c0_1, %c0_2, %c0_3] : memref<1x4x256xf32, #tpu.memory_space<vmem>>, vector<1x4x256xf32>
    %3 = vector.shape_cast %2 : vector<1x4x256xf32> to vector<4x256xf32>
    %4 = arith.truncf %3 : vector<4x256xf32> to vector<4x256xbf16>
    %c0_4 = arith.constant 0 : index
    %c128 = arith.constant 128 : index
    %5 = vector.load %arg7[%c0_4, %c128] : memref<48x512xbf16, #tpu.memory_space<vmem>>, vector<4x256xbf16>
    tpu.vector_store %arg7[%c0_4, %c128], %4 {strides = array<i32>} : memref<48x512xbf16, #tpu.memory_space<vmem>>, vector<4x256xbf16>,
    %c0_5 = arith.constant 0 : index
    %c0_6 = arith.constant 0 : index
    %c0_7 = arith.constant 0 : index
    %6 = vector.load %arg2[%c0_5, %c0_6, %c0_7] : memref<1x32x256xf32, #tpu.memory_space<vmem>>, vector<1x32x256xf32>
    %7 = vector.shape_cast %6 : vector<1x32x256xf32> to vector<32x256xf32>
    %8 = arith.truncf %7 : vector<32x256xf32> to vector<32x256xbf16>
    %c4 = arith.constant 4 : index
    %c128_8 = arith.constant 128 : index
    %9 = vector.load %arg7[%c4, %c128_8] : memref<48x512xbf16, #tpu.memory_space<vmem>>, vector<32x256xbf16>
    tpu.vector_store %arg7[%c4, %c128_8], %8 {strides = array<i32>} : memref<48x512xbf16, #tpu.memory_space<vmem>>, vector<32x256xbf16>,
    %cst_9 = arith.constant 1.000000e+00 : bf16
    %10 = vector.broadcast %cst_9 : bf16 to vector<1x256xbf16>
    %c36 = arith.constant 36 : index
    %c128_10 = arith.constant 128 : index
    %11 = vector.load %arg7[%c36, %c128_10] : memref<48x512xbf16, #tpu.memory_space<vmem>>, vector<1x256xbf16>
    tpu.vector_store %arg7[%c36, %c128_10], %10 {strides = array<i32>} : memref<48x512xbf16, #tpu.memory_space<vmem>>, vector<1x256xbf16>,
    %12 = tpu.iota {dimensions = array<i32: 1>} : vector<48x256xi32>
    %c16_i32 = arith.constant 16 : i32
    %c0_i32 = arith.constant 0 : i32
    %13 = arith.cmpi eq, %c16_i32, %c0_i32 : i32
    %c1_i32 = arith.constant 1 : i32
    %14 = arith.select %13, %c1_i32, %c16_i32 : i32
    %15 = vector.broadcast %14 : i32 to vector<48x256xi32>
    %16 = arith.remsi %12, %15 : vector<48x256xi32>
    %c0_i32_11 = arith.constant 0 : i32
    %17 = vector.broadcast %c0_i32_11 : i32 to vector<48x256xi32>
    %18 = arith.cmpi ne, %16, %17 : vector<48x256xi32>
    %c0_i32_12 = arith.constant 0 : i32
    %19 = vector.broadcast %c0_i32_12 : i32 to vector<48x256xi32>
    %20 = arith.cmpi slt, %16, %19 : vector<48x256xi32>
    %c0_i32_13 = arith.constant 0 : i32
    %21 = arith.cmpi slt, %14, %c0_i32_13 : i32
    %22 = vector.broadcast %21 : i1 to vector<48x256xi1>
    %23 = vector.broadcast %22 : vector<48x256xi1> to vector<48x256xi1>
    %24 = arith.xori %20, %23 : vector<48x256xi1>
    %25 = arith.andi %24, %18 : vector<48x256xi1>
    %26 = vector.broadcast %14 : i32 to vector<48x256xi32>
    %27 = arith.addi %16, %26 : vector<48x256xi32>
    %28 = arith.select %25, %27, %16 : vector<48x256xi1>, vector<48x256xi32>
    %c1_i32_14 = arith.constant 1 : i32
    %29 = vector.broadcast %c1_i32_14 : i32 to vector<48x256xi32>
    %30 = arith.cmpi sge, %28, %29 : vector<48x256xi32>
    %c15_i32 = arith.constant 15 : i32
    %31 = vector.broadcast %c15_i32 : i32 to vector<48x256xi32>
    %32 = arith.cmpi slt, %28, %31 : vector<48x256xi32>
    %c0_15 = arith.constant 0 : index
    %c111 = arith.constant 111 : index
    %33 = vector.load %arg7[%c0_15, %c111] : memref<48x512xbf16, #tpu.memory_space<vmem>>, vector<48x256xbf16>
    %cst_16 = arith.constant 0.000000e+00 : bf16
    %34 = vector.broadcast %cst_16 : bf16 to vector<48x256xbf16>
    %35 = arith.select %30, %33, %34 : vector<48x256xi1>, vector<48x256xbf16>
    %c0_17 = arith.constant 0 : index
    %c0_18 = arith.constant 0 : index
    %36 = vector.load %arg8[%c0_17, %c0_18] : memref<432x256xbf16, #tpu.memory_space<vmem>>, vector<48x256xbf16>
    tpu.vector_store %arg8[%c0_17, %c0_18], %35 {strides = array<i32>} : memref<432x256xbf16, #tpu.memory_space<vmem>>, vector<48x256xbf16>,
    %c0_19 = arith.constant 0 : index
    %c112 = arith.constant 112 : index
    %37 = vector.load %arg7[%c0_19, %c112] : memref<48x512xbf16, #tpu.memory_space<vmem>>, vector<48x256xbf16>
    %c48 = arith.constant 48 : index
    %c0_20 = arith.constant 0 : index
    %38 = vector.load %arg8[%c48, %c0_20] : memref<432x256xbf16, #tpu.memory_space<vmem>>, vector<48x256xbf16>
    tpu.vector_store %arg8[%c48, %c0_20], %37 {strides = array<i32>} : memref<432x256xbf16, #tpu.memory_space<vmem>>, vector<48x256xbf16>,
    %c0_21 = arith.constant 0 : index
    %c113 = arith.constant 113 : index
    %39 = vector.load %arg7[%c0_21, %c113] : memref<48x512xbf16, #tpu.memory_space<vmem>>, vector<48x256xbf16>
    %cst_22 = arith.constant 0.000000e+00 : bf16
    %40 = vector.broadcast %cst_22 : bf16 to vector<48x256xbf16>
    %41 = arith.select %32, %39, %40 : vector<48x256xi1>, vector<48x256xbf16>
    %c96 = arith.constant 96 : index
    %c0_23 = arith.constant 0 : index
    %42 = vector.load %arg8[%c96, %c0_23] : memref<432x256xbf16, #tpu.memory_space<vmem>>, vector<48x256xbf16>
    tpu.vector_store %arg8[%c96, %c0_23], %41 {strides = array<i32>} : memref<432x256xbf16, #tpu.memory_space<vmem>>, vector<48x256xbf16>,
    %c0_24 = arith.constant 0 : index
    %c127 = arith.constant 127 : index
    %43 = vector.load %arg7[%c0_24, %c127] : memref<48x512xbf16, #tpu.memory_space<vmem>>, vector<48x256xbf16>
    %cst_25 = arith.constant 0.000000e+00 : bf16
    %44 = vector.broadcast %cst_25 : bf16 to vector<48x256xbf16>
    %45 = arith.select %30, %43, %44 : vector<48x256xi1>, vector<48x256xbf16>
    %c144 = arith.constant 144 : index
    %c0_26 = arith.constant 0 : index
    %46 = vector.load %arg8[%c144, %c0_26] : memref<432x256xbf16, #tpu.memory_space<vmem>>, vector<48x256xbf16>
    tpu.vector_store %arg8[%c144, %c0_26], %45 {strides = array<i32>} : memref<432x256xbf16, #tpu.memory_space<vmem>>, vector<48x256xbf16>,
    %c0_27 = arith.constant 0 : index
    %c128_28 = arith.constant 128 : index
    %47 = vector.load %arg7[%c0_27, %c128_28] : memref<48x512xbf16, #tpu.memory_space<vmem>>, vector<48x256xbf16>
    %c192 = arith.constant 192 : index
    %c0_29 = arith.constant 0 : index
    %48 = vector.load %arg8[%c192, %c0_29] : memref<432x256xbf16, #tpu.memory_space<vmem>>, vector<48x256xbf16>
    tpu.vector_store %arg8[%c192, %c0_29], %47 {strides = array<i32>} : memref<432x256xbf16, #tpu.memory_space<vmem>>, vector<48x256xbf16>,
    %c0_30 = arith.constant 0 : index
    %c129 = arith.constant 129 : index
    %49 = vector.load %arg7[%c0_30, %c129] : memref<48x512xbf16, #tpu.memory_space<vmem>>, vector<48x256xbf16>
    %cst_31 = arith.constant 0.000000e+00 : bf16
    %50 = vector.broadcast %cst_31 : bf16 to vector<48x256xbf16>
    %51 = arith.select %32, %49, %50 : vector<48x256xi1>, vector<48x256xbf16>
    %c240 = arith.constant 240 : index
    %c0_32 = arith.constant 0 : index
    %52 = vector.load %arg8[%c240, %c0_32] : memref<432x256xbf16, #tpu.memory_space<vmem>>, vector<48x256xbf16>
    tpu.vector_store %arg8[%c240, %c0_32], %51 {strides = array<i32>} : memref<432x256xbf16, #tpu.memory_space<vmem>>, vector<48x256xbf16>,
    %c0_33 = arith.constant 0 : index
    %c143 = arith.constant 143 : index
    %53 = vector.load %arg7[%c0_33, %c143] : memref<48x512xbf16, #tpu.memory_space<vmem>>, vector<48x256xbf16>
    %cst_34 = arith.constant 0.000000e+00 : bf16
    %54 = vector.broadcast %cst_34 : bf16 to vector<48x256xbf16>
    %55 = arith.select %30, %53, %54 : vector<48x256xi1>, vector<48x256xbf16>
    %c288 = arith.constant 288 : index
    %c0_35 = arith.constant 0 : index
    %56 = vector.load %arg8[%c288, %c0_35] : memref<432x256xbf16, #tpu.memory_space<vmem>>, vector<48x256xbf16>
    tpu.vector_store %arg8[%c288, %c0_35], %55 {strides = array<i32>} : memref<432x256xbf16, #tpu.memory_space<vmem>>, vector<48x256xbf16>,
    %c0_36 = arith.constant 0 : index
    %c144_37 = arith.constant 144 : index
    %57 = vector.load %arg7[%c0_36, %c144_37] : memref<48x512xbf16, #tpu.memory_space<vmem>>, vector<48x256xbf16>
    %c336 = arith.constant 336 : index
    %c0_38 = arith.constant 0 : index
    %58 = vector.load %arg8[%c336, %c0_38] : memref<432x256xbf16, #tpu.memory_space<vmem>>, vector<48x256xbf16>
    tpu.vector_store %arg8[%c336, %c0_38], %57 {strides = array<i32>} : memref<432x256xbf16, #tpu.memory_space<vmem>>, vector<48x256xbf16>,
    %c0_39 = arith.constant 0 : index
    %c145 = arith.constant 145 : index
    %59 = vector.load %arg7[%c0_39, %c145] : memref<48x512xbf16, #tpu.memory_space<vmem>>, vector<48x256xbf16>
    %cst_40 = arith.constant 0.000000e+00 : bf16
    %60 = vector.broadcast %cst_40 : bf16 to vector<48x256xbf16>
    %61 = arith.select %32, %59, %60 : vector<48x256xi1>, vector<48x256xbf16>
    %c384 = arith.constant 384 : index
    %c0_41 = arith.constant 0 : index
    %62 = vector.load %arg8[%c384, %c0_41] : memref<432x256xbf16, #tpu.memory_space<vmem>>, vector<48x256xbf16>
    tpu.vector_store %arg8[%c384, %c0_41], %61 {strides = array<i32>} : memref<432x256xbf16, #tpu.memory_space<vmem>>, vector<48x256xbf16>,
    %c0_42 = arith.constant 0 : index
    %c0_43 = arith.constant 0 : index
    %63 = vector.load %arg4[%c0_42, %c0_43] : memref<128x432xbf16, #tpu.memory_space<vmem>>, vector<128x432xbf16>
    %c0_44 = arith.constant 0 : index
    %c0_45 = arith.constant 0 : index
    %64 = vector.load %arg8[%c0_44, %c0_45] : memref<432x256xbf16, #tpu.memory_space<vmem>>, vector<432x128xbf16>
    %cst_46 = arith.constant dense<0.000000e+00> : vector<128x128xf32>
    %65 = tpu.matmul %63, %64, %cst_46 {dimension_numbers = #tpu.dot_dimension_numbers<[1], [0], [0], [1], [0, 0, 1, 1], [], []>} : vector<128x432xbf16>, vector<432x128xbf16>, vector<128x128xf32> -> vector<128x128xf32>
    %66 = vector.extract_strided_slice %65 {offsets = [0, 0], sizes = [32, 128], strides = [1, 1]} : vector<128x128xf32> to vector<32x128xf32>
    %cst_47 = arith.constant 5.000000e-01 : f32
    %67 = vector.broadcast %cst_47 : f32 to vector<32x128xf32>
    %68 = arith.mulf %67, %66 : vector<32x128xf32>
    %69 = math.tanh %68 : vector<32x128xf32>
    %cst_48 = arith.constant 5.000000e-01 : f32
    %70 = vector.broadcast %cst_48 : f32 to vector<32x128xf32>
    %71 = arith.mulf %70, %69 : vector<32x128xf32>
    %cst_49 = arith.constant 5.000000e-01 : f32
    %72 = vector.broadcast %cst_49 : f32 to vector<32x128xf32>
    %73 = arith.addf %71, %72 : vector<32x128xf32>
    %74 = vector.extract_strided_slice %65 {offsets = [32, 0], sizes = [32, 128], strides = [1, 1]} : vector<128x128xf32> to vector<32x128xf32>
    %cst_50 = arith.constant 5.000000e-01 : f32
    %75 = vector.broadcast %cst_50 : f32 to vector<32x128xf32>
    %76 = arith.mulf %75, %74 : vector<32x128xf32>
    %77 = math.tanh %76 : vector<32x128xf32>
    %cst_51 = arith.constant 5.000000e-01 : f32
    %78 = vector.broadcast %cst_51 : f32 to vector<32x128xf32>
    %79 = arith.mulf %78, %77 : vector<32x128xf32>
    %cst_52 = arith.constant 5.000000e-01 : f32
    %80 = vector.broadcast %cst_52 : f32 to vector<32x128xf32>
    %81 = arith.addf %79, %80 : vector<32x128xf32>
    %82 = vector.extract_strided_slice %65 {offsets = [64, 0], sizes = [32, 128], strides = [1, 1]} : vector<128x128xf32> to vector<32x128xf32>
    %cst_53 = arith.constant 5.000000e-01 : f32
    %83 = vector.broadcast %cst_53 : f32 to vector<32x128xf32>
    %84 = arith.mulf %83, %82 : vector<32x128xf32>
    %85 = math.tanh %84 : vector<32x128xf32>
    %cst_54 = arith.constant 5.000000e-01 : f32
    %86 = vector.broadcast %cst_54 : f32 to vector<32x128xf32>
    %87 = arith.mulf %86, %85 : vector<32x128xf32>
    %cst_55 = arith.constant 5.000000e-01 : f32
    %88 = vector.broadcast %cst_55 : f32 to vector<32x128xf32>
    %89 = arith.addf %87, %88 : vector<32x128xf32>
    %90 = vector.extract_strided_slice %65 {offsets = [96, 0], sizes = [32, 128], strides = [1, 1]} : vector<128x128xf32> to vector<32x128xf32>
    %91 = math.tanh %90 : vector<32x128xf32>
    %c0_56 = arith.constant 0 : index
    %c0_57 = arith.constant 0 : index
    %c0_58 = arith.constant 0 : index
    %92 = vector.load %arg3[%c0_56, %c0_57, %c0_58] : memref<1x32x256xf32, #tpu.memory_space<vmem>>, vector<1x32x128xf32>
    %93 = vector.shape_cast %92 : vector<1x32x128xf32> to vector<32x128xf32>
    %94 = arith.mulf %81, %93 : vector<32x128xf32>
    %95 = arith.mulf %73, %91 : vector<32x128xf32>
    %96 = arith.addf %94, %95 : vector<32x128xf32>
    %97 = math.tanh %96 : vector<32x128xf32>
    %98 = arith.mulf %89, %97 : vector<32x128xf32>
    %c0_59 = arith.constant 0 : index
    %c0_60 = arith.constant 0 : index
    %c0_61 = arith.constant 0 : index
    %99 = vector.load %arg6[%c0_59, %c0_60, %c0_61] : memref<1x32x256xf32, #tpu.memory_space<vmem>>, vector<1x32x128xf32>
    %100 = vector.shape_cast %99 : vector<1x32x128xf32> to vector<32x128xf32>
    %101 = vector.shape_cast %96 : vector<32x128xf32> to vector<1x32x128xf32>
    tpu.vector_store %arg6[%c0_59, %c0_60, %c0_61], %101 {strides = array<i32>} : memref<1x32x256xf32, #tpu.memory_space<vmem>>, vector<1x32x128xf32>,
    %c0_62 = arith.constant 0 : index
    %c0_63 = arith.constant 0 : index
    %c0_64 = arith.constant 0 : index
    %102 = vector.load %arg5[%c0_62, %c0_63, %c0_64] : memref<1x32x256xf32, #tpu.memory_space<vmem>>, vector<1x32x128xf32>
    %103 = vector.shape_cast %102 : vector<1x32x128xf32> to vector<32x128xf32>
    %104 = vector.shape_cast %98 : vector<32x128xf32> to vector<1x32x128xf32>
    tpu.vector_store %arg5[%c0_62, %c0_63, %c0_64], %104 {strides = array<i32>} : memref<1x32x256xf32, #tpu.memory_space<vmem>>, vector<1x32x128xf32>,
    %c0_65 = arith.constant 0 : index
    %c0_66 = arith.constant 0 : index
    %105 = vector.load %arg4[%c0_65, %c0_66] : memref<128x432xbf16, #tpu.memory_space<vmem>>, vector<128x432xbf16>
    %c0_67 = arith.constant 0 : index
    %c128_68 = arith.constant 128 : index
    %106 = vector.load %arg8[%c0_67, %c128_68] : memref<432x256xbf16, #tpu.memory_space<vmem>>, vector<432x128xbf16>
    %cst_69 = arith.constant dense<0.000000e+00> : vector<128x128xf32>
    %107 = tpu.matmul %105, %106, %cst_69 {dimension_numbers = #tpu.dot_dimension_numbers<[1], [0], [0], [1], [0, 0, 1, 1], [], []>} : vector<128x432xbf16>, vector<432x128xbf16>, vector<128x128xf32> -> vector<128x128xf32>
    %108 = vector.extract_strided_slice %107 {offsets = [0, 0], sizes = [32, 128], strides = [1, 1]} : vector<128x128xf32> to vector<32x128xf32>
    %cst_70 = arith.constant 5.000000e-01 : f32
    %109 = vector.broadcast %cst_70 : f32 to vector<32x128xf32>
    %110 = arith.mulf %109, %108 : vector<32x128xf32>
    %111 = math.tanh %110 : vector<32x128xf32>
    %cst_71 = arith.constant 5.000000e-01 : f32
    %112 = vector.broadcast %cst_71 : f32 to vector<32x128xf32>
    %113 = arith.mulf %112, %111 : vector<32x128xf32>
    %cst_72 = arith.constant 5.000000e-01 : f32
    %114 = vector.broadcast %cst_72 : f32 to vector<32x128xf32>
    %115 = arith.addf %113, %114 : vector<32x128xf32>
    %116 = vector.extract_strided_slice %107 {offsets = [32, 0], sizes = [32, 128], strides = [1, 1]} : vector<128x128xf32> to vector<32x128xf32>
    %cst_73 = arith.constant 5.000000e-01 : f32
    %117 = vector.broadcast %cst_73 : f32 to vector<32x128xf32>
    %118 = arith.mulf %117, %116 : vector<32x128xf32>
    %119 = math.tanh %118 : vector<32x128xf32>
    %cst_74 = arith.constant 5.000000e-01 : f32
    %120 = vector.broadcast %cst_74 : f32 to vector<32x128xf32>
    %121 = arith.mulf %120, %119 : vector<32x128xf32>
    %cst_75 = arith.constant 5.000000e-01 : f32
    %122 = vector.broadcast %cst_75 : f32 to vector<32x128xf32>
    %123 = arith.addf %121, %122 : vector<32x128xf32>
    %124 = vector.extract_strided_slice %107 {offsets = [64, 0], sizes = [32, 128], strides = [1, 1]} : vector<128x128xf32> to vector<32x128xf32>
    %cst_76 = arith.constant 5.000000e-01 : f32
    %125 = vector.broadcast %cst_76 : f32 to vector<32x128xf32>
    %126 = arith.mulf %125, %124 : vector<32x128xf32>
    %127 = math.tanh %126 : vector<32x128xf32>
    %cst_77 = arith.constant 5.000000e-01 : f32
    %128 = vector.broadcast %cst_77 : f32 to vector<32x128xf32>
    %129 = arith.mulf %128, %127 : vector<32x128xf32>
    %cst_78 = arith.constant 5.000000e-01 : f32
    %130 = vector.broadcast %cst_78 : f32 to vector<32x128xf32>
    %131 = arith.addf %129, %130 : vector<32x128xf32>
    %132 = vector.extract_strided_slice %107 {offsets = [96, 0], sizes = [32, 128], strides = [1, 1]} : vector<128x128xf32> to vector<32x128xf32>
    %133 = math.tanh %132 : vector<32x128xf32>
    %c0_79 = arith.constant 0 : index
    %c0_80 = arith.constant 0 : index
    %c128_81 = arith.constant 128 : index
    %134 = vector.load %arg3[%c0_79, %c0_80, %c128_81] : memref<1x32x256xf32, #tpu.memory_space<vmem>>, vector<1x32x128xf32>
    %135 = vector.shape_cast %134 : vector<1x32x128xf32> to vector<32x128xf32>
    %136 = arith.mulf %123, %135 : vector<32x128xf32>
    %137 = arith.mulf %115, %133 : vector<32x128xf32>
    %138 = arith.addf %136, %137 : vector<32x128xf32>
    %139 = math.tanh %138 : vector<32x128xf32>
    %140 = arith.mulf %131, %139 : vector<32x128xf32>
    %c0_82 = arith.constant 0 : index
    %c0_83 = arith.constant 0 : index
    %c128_84 = arith.constant 128 : index
    %141 = vector.load %arg6[%c0_82, %c0_83, %c128_84] : memref<1x32x256xf32, #tpu.memory_space<vmem>>, vector<1x32x128xf32>
    %142 = vector.shape_cast %141 : vector<1x32x128xf32> to vector<32x128xf32>
    %143 = vector.shape_cast %138 : vector<32x128xf32> to vector<1x32x128xf32>
    tpu.vector_store %arg6[%c0_82, %c0_83, %c128_84], %143 {strides = array<i32>} : memref<1x32x256xf32, #tpu.memory_space<vmem>>, vector<1x32x128xf32>,
    %c0_85 = arith.constant 0 : index
    %c0_86 = arith.constant 0 : index
    %c128_87 = arith.constant 128 : index
    %144 = vector.load %arg5[%c0_85, %c0_86, %c128_87] : memref<1x32x256xf32, #tpu.memory_space<vmem>>, vector<1x32x128xf32>
    %145 = vector.shape_cast %144 : vector<1x32x128xf32> to vector<32x128xf32>
    %146 = vector.shape_cast %140 : vector<32x128xf32> to vector<1x32x128xf32>
    tpu.vector_store %arg5[%c0_85, %c0_86, %c128_87], %146 {strides = array<i32>} : memref<1x32x256xf32, #tpu.memory_space<vmem>>, vector<1x32x128xf32>,
    return
  }
  func.func @transform_0(%arg0: i32) -> (i32, i32, i32) {
    %c0_i32 = arith.constant 0 : i32
    %c0_i32_0 = arith.constant 0 : i32
    %c0_i32_1 = arith.constant 0 : i32
    return %arg0, %c0_i32, %c0_i32_0 : i32, i32, i32
  }
  func.func @transform_1(%arg0: i32) -> (i32, i32, i32) {
    %c0_i32 = arith.constant 0 : i32
    %c0_i32_0 = arith.constant 0 : i32
    %c0_i32_1 = arith.constant 0 : i32
    return %arg0, %c0_i32, %c0_i32_0 : i32, i32, i32
  }
  func.func @transform_2(%arg0: i32) -> (i32, i32, i32) {
    %c0_i32 = arith.constant 0 : i32
    %c0_i32_0 = arith.constant 0 : i32
    %c0_i32_1 = arith.constant 0 : i32
    return %arg0, %c0_i32, %c0_i32_0 : i32, i32, i32
  }
  func.func @transform_3(%arg0: i32) -> (i32, i32) {
    %c0_i32 = arith.constant 0 : i32
    %c0_i32_0 = arith.constant 0 : i32
    %c0_i32_1 = arith.constant 0 : i32
    return %c0_i32, %c0_i32_0 : i32, i32
  }
  func.func @transform_4(%arg0: i32) -> (i32, i32, i32) {
    %c0_i32 = arith.constant 0 : i32
    %c0_i32_0 = arith.constant 0 : i32
    %c0_i32_1 = arith.constant 0 : i32
    return %arg0, %c0_i32, %c0_i32_0 : i32, i32, i32
  }
  func.func @transform_5(%arg0: i32) -> (i32, i32, i32) {
    %c0_i32 = arith.constant 0 : i32
    %c0_i32_0 = arith.constant 0 : i32
    %c0_i32_1 = arith.constant 0 : i32
    return %arg0, %c0_i32, %c0_i32_0 : i32, i32, i32
  }
}

</mosaic_0001>

<llo_original>
// kernel: conv_lstm_cell.1
$region0: #{conv_lstm_cell.1}
  #allocation0 [shape = 'u32[]', space=smem, size = 0x4, offset = 0x4, fixed_abs, tag = 'smem constant byte address 0x4 - core index']
  #allocation1 [shape = 'u32[144,128]{1,0:T(1,128)}', space=vmem, size = 0x12000, scoped, tag = 'internal scratch']
  #allocation2 [shape = 'bf16[48,512]{1,0:T(16,128)(2,1)}', space=vmem, size = 0xc000, scoped, tag = 'scratch operand']
  #allocation3 [shape = 'bf16[432,256]{1,0:T(16,128)(2,1)}', space=vmem, size = 0x36000, scoped, tag = 'scratch operand']
  %s0 = inlined_call_operand.vmem [shape: f32[2,4,256], index: 0, kind: input, shape index: {}]
  %s1 = inlined_call_operand.vmem [shape: f32[2,32,256], index: 1, kind: input, shape index: {}]
  %s2 = inlined_call_operand.vmem [shape: f32[2,32,256], index: 2, kind: input, shape index: {}]
  %s3 = inlined_call_operand.vmem [shape: bf16[128,432], index: 3, kind: input, shape index: {}]
  %s4 = inlined_call_operand.vmem [shape: f32[2,32,256], index: 4, kind: output, shape index: {0}]
  %s5 = inlined_call_operand.vmem [shape: f32[2,32,256], index: 5, kind: output, shape index: {1}]
  %6 = xla_tuple %s4, %s5
  %s7 = sld [smem:[#allocation0]]
  $region57: #{conv_lstm_cell.1} parent=0
    _
  %s9 = ssub.s32 1, %s7
  %s10 = scalar_select 0, %s9, %s7
  loop: start=0, step=1, limit=4
  $region2: #{conv_lstm_cell.1} parent=0 // loop_pre_header
    _
  $region3: #{conv_lstm_cell.1} parent=0 // loop_header
    %s12 = sphi 0, %s16
    %p13 = scmp.ge.s32.totalorder %s12, 4
    %s22 = sphi 0, %s24
    %s25 = sphi 0, %s22
    %s26 = sphi 0, %s25
    %s42 = sphi 0, %s26
    %s48 = sphi 0, %s50
    %s51 = sphi 0, %s48
    %s52 = sphi 0, %s51
    %s68 = sphi 0, %s52
    %s74 = sphi 0, %s76
    %s77 = sphi 0, %s74
    %s78 = sphi 0, %s77
    %s94 = sphi 0, %s78
    %s98 = sphi 0, %s98
    %s100 = sphi 0, %s98
    %s101 = sphi 0, %s100
    %s115 = sphi 0, %s101
    %s121 = sphi 0, %s123
    %s124 = sphi 0, %s121
    %s125 = sphi 0, %s124
    %s141 = sphi 0, %s125
    %s147 = sphi 0, %s149
    %s150 = sphi 0, %s147
    %s151 = sphi 0, %s150
    %s167 = sphi 0, %s151
  $region4: #{conv_lstm_cell.1} parent=0 // loop_header_branch
    %15 = sbr.rel (%p13) target = $region8
  $region5: #{conv_lstm_cell.1} parent=0 // loop_body
    %s17 = ssub.s32 %s12, 1
    %s18 = ssub.s32 %s12, 2
    %s19 = sadd.s32 %s12, 1
    %s20 = ssub.s32 %s12, %s19
    %p21 = scmp.eq.s32.totalorder %s20, 0
    %s23 = sadd.s32 %s22, 1
    %s24 = scalar_select %p21, %s22, %s23
    %p27 = pneg %p21
    %p28 = scmp.eq.s32.totalorder %s12, 1
    %p29 = por %p27, %p28
    %p30 = scmp.ne.s32.totalorder %s22, %s25
    %p31 = scmp.eq.s32.totalorder %s12, 0
    %p32 = por %p30, %p31
    %p33 = scmp.ne.s32.totalorder %s22, %s25
    %p34 = scmp.eq.s32.totalorder %s17, 1
    %p35 = por %p33, %p34
    %p36 = scmp.ne.s32.totalorder %s25, %s26
    %p37 = scmp.eq.s32.totalorder %s17, 0
    %p38 = por %p36, %p37
    %p39 = scmp.ne.s32.totalorder %s25, %s26
    %p40 = scmp.eq.s32.totalorder %s18, 1
    %p41 = por %p39, %p40
    %p43 = scmp.ne.s32.totalorder %s26, %s42
    %p44 = scmp.eq.s32.totalorder %s18, 0
    %p45 = por %p43, %p44
    %s46 = ssub.s32 %s12, %s19
    %p47 = scmp.eq.s32.totalorder %s46, 0
    %s49 = sadd.s32 %s48, 1
    %s50 = scalar_select %p47, %s48, %s49
    %p53 = pneg %p47
    %p54 = scmp.eq.s32.totalorder %s12, 1
    %p55 = por %p53, %p54
    %p56 = scmp.ne.s32.totalorder %s48, %s51
    %p57 = scmp.eq.s32.totalorder %s12, 0
    %p58 = por %p56, %p57
    %p59 = scmp.ne.s32.totalorder %s48, %s51
    %p60 = scmp.eq.s32.totalorder %s17, 1
    %p61 = por %p59, %p60
    %p62 = scmp.ne.s32.totalorder %s51, %s52
    %p63 = scmp.eq.s32.totalorder %s17, 0
    %p64 = por %p62, %p63
    %p65 = scmp.ne.s32.totalorder %s51, %s52
    %p66 = scmp.eq.s32.totalorder %s18, 1
    %p67 = por %p65, %p66
    %p69 = scmp.ne.s32.totalorder %s52, %s68
    %p70 = scmp.eq.s32.totalorder %s18, 0
    %p71 = por %p69, %p70
    %s72 = ssub.s32 %s12, %s19
    %p73 = scmp.eq.s32.totalorder %s72, 0
    %s75 = sadd.s32 %s74, 1
    %s76 = scalar_select %p73, %s74, %s75
    %p79 = pneg %p73
    %p80 = scmp.eq.s32.totalorder %s12, 1
    %p81 = por %p79, %p80
    %p82 = scmp.ne.s32.totalorder %s74, %s77
    %p83 = scmp.eq.s32.totalorder %s12, 0
    %p84 = por %p82, %p83
    %p85 = scmp.ne.s32.totalorder %s74, %s77
    %p86 = scmp.eq.s32.totalorder %s17, 1
    %p87 = por %p85, %p86
    %p88 = scmp.ne.s32.totalorder %s77, %s78
    %p89 = scmp.eq.s32.totalorder %s17, 0
    %p90 = por %p88, %p89
    %p91 = scmp.ne.s32.totalorder %s77, %s78
    %p92 = scmp.eq.s32.totalorder %s18, 1
    %p93 = por %p91, %p92
    %p95 = scmp.ne.s32.totalorder %s78, %s94
    %p96 = scmp.eq.s32.totalorder %s18, 0
    %p97 = por %p95, %p96
    %s99 = sadd.s32 %s98, 1
    %p102 = scmp.eq.s32.totalorder %s12, 1
    %p103 = scmp.ne.s32.totalorder %s98, %s100
    %p104 = scmp.eq.s32.totalorder %s12, 0
    %p105 = por %p103, %p104
    %p106 = scmp.ne.s32.totalorder %s98, %s100
    %p107 = scmp.eq.s32.totalorder %s17, 1
    %p108 = por %p106, %p107
    %p109 = scmp.ne.s32.totalorder %s100, %s101
    %p110 = scmp.eq.s32.totalorder %s17, 0
    %p111 = por %p109, %p110
    %p112 = scmp.ne.s32.totalorder %s100, %s101
    %p113 = scmp.eq.s32.totalorder %s18, 1
    %p114 = por %p112, %p113
    %p116 = scmp.ne.s32.totalorder %s101, %s115
    %p117 = scmp.eq.s32.totalorder %s18, 0
    %p118 = por %p116, %p117
    %s119 = ssub.s32 %s12, %s19
    %p120 = scmp.eq.s32.totalorder %s119, 0
    %s122 = sadd.s32 %s121, 1
    %s123 = scalar_select %p120, %s121, %s122
    %p126 = pneg %p120
    %p127 = scmp.eq.s32.totalorder %s12, 1
    %p128 = por %p126, %p127
    %p129 = scmp.ne.s32.totalorder %s121, %s124
    %p130 = scmp.eq.s32.totalorder %s12, 0
    %p131 = por %p129, %p130
    %p132 = scmp.ne.s32.totalorder %s121, %s124
    %p133 = scmp.eq.s32.totalorder %s17, 1
    %p134 = por %p132, %p133
    %p135 = scmp.ne.s32.totalorder %s124, %s125
    %p136 = scmp.eq.s32.totalorder %s17, 0
    %p137 = por %p135, %p136
    %p138 = scmp.ne.s32.totalorder %s124, %s125
    %p139 = scmp.eq.s32.totalorder %s18, 1
    %p140 = por %p138, %p139
    %p142 = scmp.ne.s32.totalorder %s125, %s141
    %p143 = scmp.eq.s32.totalorder %s18, 0
    %p144 = por %p142, %p143
    %s145 = ssub.s32 %s12, %s19
    %p146 = scmp.eq.s32.totalorder %s145, 0
    %s148 = sadd.s32 %s147, 1
    %s149 = scalar_select %p146, %s147, %s148
    %p152 = pneg %p146
    %p153 = scmp.eq.s32.totalorder %s12, 1
    %p154 = por %p152, %p153
    %p155 = scmp.ne.s32.totalorder %s147, %s150
    %p156 = scmp.eq.s32.totalorder %s12, 0
    %p157 = por %p155, %p156
    %p158 = scmp.ne.s32.totalorder %s147, %s150
    %p159 = scmp.eq.s32.totalorder %s17, 1
    %p160 = por %p158, %p159
    %p161 = scmp.ne.s32.totalorder %s150, %s151
    %p162 = scmp.eq.s32.totalorder %s17, 0
    %p163 = por %p161, %p162
    %p164 = scmp.ne.s32.totalorder %s150, %s151
    %p165 = scmp.eq.s32.totalorder %s18, 1
    %p166 = por %p164, %p165
    %p168 = scmp.ne.s32.totalorder %s151, %s167
    %p169 = scmp.eq.s32.totalorder %s18, 0
    %p170 = por %p168, %p169
    %p171 = scmp.le.s32.totalorder 1, %s12
    %p172 = scmp.lt.s32.totalorder %s12, 3
    %p173 = pnand %p171, %p172
    %p174 = pneg %p173
    // Predicated region
    $region9: #{conv_lstm_cell.1} parent=5 // pred_check
      _
    $region10: #{conv_lstm_cell.1} parent=5 // pred_check_branch
      %176 = sbr.rel (%p173) target = $region12
    $region11: #{conv_lstm_cell.1} parent=5 // pred_region
      %s177 = ssub.s32 %s12, 1
      // Predicated region
      $region13: #{conv_lstm_cell.1} parent=11 // pred_check
        %p178 = pneg %p111
      $region14: #{conv_lstm_cell.1} parent=11 // pred_check_branch
        %180 = sbr.rel (%p178) target = $region16
      $region15: #{conv_lstm_cell.1} parent=11 // pred_region
        _
      $region16: #{conv_lstm_cell.1} parent=11 // pred_fallthru
        _
    $region12: #{conv_lstm_cell.1} parent=5 // pred_fallthru
      _
    %p181 = scmp.lt.s32.totalorder %s12, 2
    // Predicated region
    $region17: #{conv_lstm_cell.1} parent=5 // pred_check
      %p182 = pneg %p181
    $region18: #{conv_lstm_cell.1} parent=5 // pred_check_branch
      %184 = sbr.rel (%p182) target = $region20
    $region19: #{conv_lstm_cell.1} parent=5 // pred_region
      // Predicated region
      $region21: #{conv_lstm_cell.1} parent=19 // pred_check
        %p185 = pneg %p32
      $region22: #{conv_lstm_cell.1} parent=19 // pred_check_branch
        %187 = sbr.rel (%p185) target = $region24
      $region23: #{conv_lstm_cell.1} parent=19 // pred_region
        %p188 = scmp.lt.s32.totalorder %s12, 1
        %s189 = scalar_select %p188, %s12, 1
        %s190 = smul.addr %s189, 2
        %s191 = smul.addr %s190, 4
        %s192 = scalar_lea.vmem %s0, %s191
      $region24: #{conv_lstm_cell.1} parent=19 // pred_fallthru
        _
      // Predicated region
      $region25: #{conv_lstm_cell.1} parent=19 // pred_check
        %p193 = pneg %p58
      $region26: #{conv_lstm_cell.1} parent=19 // pred_check_branch
        %195 = sbr.rel (%p193) target = $region28
      $region27: #{conv_lstm_cell.1} parent=19 // pred_region
        %p196 = scmp.lt.s32.totalorder %s12, 1
        %s197 = scalar_select %p196, %s12, 1
        %s198 = smul.addr %s197, 8
        %s199 = smul.addr %s198, 8
        %s200 = scalar_lea.vmem %s1, %s199
      $region28: #{conv_lstm_cell.1} parent=19 // pred_fallthru
        _
      // Predicated region
      $region29: #{conv_lstm_cell.1} parent=19 // pred_check
        %p201 = pneg %p84
      $region30: #{conv_lstm_cell.1} parent=19 // pred_check_branch
        %203 = sbr.rel (%p201) target = $region32
      $region31: #{conv_lstm_cell.1} parent=19 // pred_region
        %p204 = scmp.lt.s32.totalorder %s12, 1
        %s205 = scalar_select %p204, %s12, 1
        %s206 = smul.addr %s205, 8
        %s207 = smul.addr %s206, 8
        %s208 = scalar_lea.vmem %s2, %s207
      $region32: #{conv_lstm_cell.1} parent=19 // pred_fallthru
        _
    $region20: #{conv_lstm_cell.1} parent=5 // pred_fallthru
      _
    %p209 = scmp.le.s32.totalorder 1, %s12
    %p210 = scmp.lt.s32.totalorder %s12, 3
    %p211 = pnand %p209, %p210
    %p212 = pneg %p211
    // Predicated region
    $region33: #{conv_lstm_cell.1} parent=5 // pred_check
      _
    $region34: #{conv_lstm_cell.1} parent=5 // pred_check_branch
      %214 = sbr.rel (%p211) target = $region36
    $region35: #{conv_lstm_cell.1} parent=5 // pred_region
      %s215 = ssub.s32 %s12, 1
      %p216 = scmp.lt.s32.totalorder %s17, 1
      %s217 = scalar_select %p216, %s17, 1
      %s218 = smul.addr %s217, 2
      %s219 = smul.addr %s218, 4
      %s220 = scalar_lea.vmem %s0, %s219
      %p221 = pneg %p38
      %p222 = pneg %p35
      %p223 = scmp.lt.s32.totalorder %s17, 1
      %s224 = scalar_select %p223, %s17, 1
      %s225 = smul.addr %s224, 8
      %s226 = smul.addr %s225, 8
      %s227 = scalar_lea.vmem %s1, %s226
      %p228 = pneg %p64
      %p229 = pneg %p61
      %p230 = scmp.lt.s32.totalorder %s17, 1
      %s231 = scalar_select %p230, %s17, 1
      %s232 = smul.addr %s231, 8
      %s233 = smul.addr %s232, 8
      %s234 = scalar_lea.vmem %s2, %s233
      %p235 = pneg %p90
      %p236 = pneg %p87
      %p237 = pneg %p111
      %p238 = pneg %p108
      %p239 = pneg %p137
      %p240 = pneg %p134
      %p241 = scmp.lt.s32.totalorder %s17, 1
      %s242 = scalar_select %p241, %s17, 1
      %s243 = smul.addr %s242, 8
      %s244 = smul.addr %s243, 8
      %s245 = scalar_lea.vmem %s4, %s244
      %p246 = pneg %p163
      %p247 = pneg %p160
      %p248 = scmp.lt.s32.totalorder %s17, 1
      %s249 = scalar_select %p248, %s17, 1
      %s250 = smul.addr %s249, 8
      %s251 = smul.addr %s250, 8
      %s252 = scalar_lea.vmem %s5, %s251
      %p253 = scmp.lt.s32.totalorder %s17, 1
      %s254 = scalar_select %p253, %s17, 1
      %s255 = smul.addr %s254, 2
      %s256 = smul.addr %s255, 4
      %s257 = scalar_lea.vmem %s0, %s256
      %p258 = scmp.lt.s32.totalorder %s17, 1
      %s259 = scalar_select %p258, %s17, 1
      %s260 = smul.addr %s259, 8
      %s261 = smul.addr %s260, 8
      %s262 = scalar_lea.vmem %s1, %s261
      %p263 = scmp.lt.s32.totalorder %s17, 1
      %s264 = scalar_select %p263, %s17, 1
      %s265 = smul.addr %s264, 8
      %s266 = smul.addr %s265, 8
      %s267 = scalar_lea.vmem %s2, %s266
      %p268 = scmp.lt.s32.totalorder %s17, 1
      %s269 = scalar_select %p268, %s17, 1
      %s270 = smul.addr %s269, 8
      %s271 = smul.addr %s270, 8
      %s272 = scalar_lea.vmem %s4, %s271
      %p273 = scmp.lt.s32.totalorder %s17, 1
      %s274 = scalar_select %p273, %s17, 1
      %s275 = smul.addr %s274, 8
      %s276 = smul.addr %s275, 8
      %s277 = scalar_lea.vmem %s5, %s276
      %282 = vst [vmem:[#allocation2] sm:$0xff] 0
      %283 = vst [vmem:[#allocation2 + $0x8] sm:$0xff] 0
      %284 = vst [vmem:[#allocation2 + $0x10] sm:$0xff] 0
      %285 = vst [vmem:[#allocation2 + $0x18] sm:$0xff] 0
      %286 = vst [vmem:[#allocation2 + $0x20] sm:$0xff] 0
      %287 = vst [vmem:[#allocation2 + $0x28] sm:$0xff] 0
      %288 = vst [vmem:[#allocation2 + $0x30] sm:$0xff] 0
      %289 = vst [vmem:[#allocation2 + $0x38] sm:$0xff] 0
      %290 = vst [vmem:[#allocation2 + $0x40] sm:$0xff] 0
      %291 = vst [vmem:[#allocation2 + $0x48] sm:$0xff] 0
      %292 = vst [vmem:[#allocation2 + $0x50] sm:$0xff] 0
      %293 = vst [vmem:[#allocation2 + $0x58] sm:$0xff] 0
      %v294 = vld [vmem:[%s257] sm:$0xff]
      %v296 = vcombine.high %v294, %v294
      %v298 = vpack.c.bf16 %v294, %v294
      %v299 = vpack.c.bf16 %v296, %v296
      %300 = vst [vmem:[#allocation2 + $0x8] sm:$0x3] %v298
      %301 = vst [vmem:[#allocation2 + $0x10] sm:$0x3] %v299
      %v302 = vld [vmem:[%s262] sm:$0xff]
      %v303 = vld [vmem:[%s262 + $0x8] sm:$0xff]
      %v304 = vld [vmem:[%s262 + $0x10] sm:$0xff]
      %v305 = vld [vmem:[%s262 + $0x18] sm:$0xff]
      %v306 = vld [vmem:[%s262 + $0x20] sm:$0xff]
      %v307 = vld [vmem:[%s262 + $0x28] sm:$0xff]
      %v308 = vld [vmem:[%s262 + $0x30] sm:$0xff]
      %v309 = vld [vmem:[%s262 + $0x38] sm:$0xff]
      %v310 = vpack.c.bf16 %v304, %v302
      %v311 = vpack.c.bf16 %v305, %v303
      %v312 = vpack.c.bf16 %v308, %v306
      %v313 = vpack.c.bf16 %v309, %v307
      %vm318 = vcmask 1041408
      %v319 = vrot.slane %v310, 6
      %v320 = vrot.slane %v311, 6
      %v321 = vrot.slane %v312, 6
      %v322 = vsel %vm318, %v319, %v321
      %v323 = vrot.slane %v313, 6
      %v324 = vsel %vm318, %v320, %v323
      %331 = vst [vmem:[#allocation2 + $0x8] sm:$0xfc] %v319
      %332 = vst [vmem:[#allocation2 + $0x10] sm:$0xfc] %v320
      %333 = vst [vmem:[#allocation2 + $0x28] sm:$0xff] %v322
      %334 = vst [vmem:[#allocation2 + $0x30] sm:$0xff] %v324
      %335 = vst [vmem:[#allocation2 + $0x48] sm:$0x3] %v321
      %336 = vst [vmem:[#allocation2 + $0x50] sm:$0x3] %v323
      %vm337 = vcmask 1042434
      %vm338 = vsmask.f32 2304
      %vm339 = vmand %vm337, %vm338
      %v340 = vld [vmem:[#allocation2 + $0x48] sm:$0x4]
      %v341 = vsel %vm339, 1065369472, %v340
      %342 = vst [vmem:[#allocation2 + $0x48] sm:$0x4] %v341
      %v343 = vld [vmem:[#allocation2 + $0x50] sm:$0x4]
      %v344 = vsel %vm339, 1065369472, %v343
      %345 = vst [vmem:[#allocation2 + $0x50] sm:$0x4] %v344
      %v346 = vlaneseq
      %v347 = vand.u32 %v346, 127
      %v348 = vadd.s32 %v347, 128
      %vm349 = vcmp.lt.s32.totalorder %v347, 0
      %v350 = vsub.s32 0, %v347
      %v351 = vsel %vm349, %v350, %v347
      %v352 = vshrl.u32 %v351, 4
      %v353 = vand.u32 %v351, 15
      %v354 = vsub.s32 0, %v353
      %v355 = vsel %vm349, %v354, %v353
      %vm356 = vcmp.lt.s32.totalorder %v348, 0
      %v357 = vsub.s32 0, %v348
      %v358 = vsel %vm356, %v357, %v348
      %v359 = vshrl.u32 %v358, 4
      %v360 = vand.u32 %v358, 15
      %v361 = vsub.s32 0, %v360
      %v362 = vsel %vm356, %v361, %v360
      %vm363 = vcmp.ne.s32.totalorder %v355, 0
      %vm364 = vcmp.ne.s32.totalorder %v362, 0
      %vm365 = vcmp.lt.s32.totalorder %v355, 0
      %vm366 = vcmp.lt.s32.totalorder %v362, 0
      %vm367 = vmand %vm365, %vm363
      %vm368 = vmand %vm366, %vm364
      %v369 = vadd.s32 %v355, 16
      %v370 = vadd.s32 %v362, 16
      %v371 = vsel %vm367, %v369, %v355
      %v372 = vsel %vm368, %v370, %v362
      %vm373 = vcmp.ge.s32.totalorder %v371, 1
      %vm374 = vcmp.ge.s32.totalorder %v372, 1
      %vm375 = vcmp.lt.s32.totalorder %v371, 15
      %vm376 = vcmp.lt.s32.totalorder %v372, 15
      %v377 = vld [vmem:[#allocation2] sm:$0xff]
      %v378 = vld [vmem:[#allocation2 + $0x8] sm:$0xff]
      %v379 = vld [vmem:[#allocation2 + $0x10] sm:$0xff]
      %v380 = vld [vmem:[#allocation2 + $0x20] sm:$0xff]
      %v381 = vld [vmem:[#allocation2 + $0x28] sm:$0xff]
      %v382 = vld [vmem:[#allocation2 + $0x30] sm:$0xff]
      %v383 = vld [vmem:[#allocation2 + $0x40] sm:$0xff]
      %v384 = vld [vmem:[#allocation2 + $0x48] sm:$0xff]
      %v385 = vld [vmem:[#allocation2 + $0x50] sm:$0xff]
      %vm386 = vmpackc.low %vm374, %vm373
      %v387 = vsel %vm386, 65537, 0
      %v388 = vlaneseq
      %v389 = vshrl.u32 %v388, 7
      %v390 = vsub.s32 0, %v389
      %v391 = vrot.slane %v387, %v390
      %v392 = vlaneseq
      %v393 = vshrl.u32 %v392, 7
      %v394 = vsub.s32 4, %v393
      %v395 = vrot.slane %v387, %v394
      %396 = vrot.lane.b32.xlu0 %v391, 111
      %v397 = vpop.permute.xlu0 %396
      %398 = vrot.lane.b32.xlu0 %v395, 111
      %v399 = vpop.permute.xlu0 %398
      %vm400 = vcmask 908288
      %v401 = vsel %vm400, %v397, %v399
      %vm402 = vcmp.ne.s16.totalorder %v397, 0
      %vm403 = vcmp.ne.s16.totalorder %v401, 0
      %vm404 = vcmp.ne.s16.totalorder %v399, 0
      %v405 = vsel %vm402, %v377, 0
      %v406 = vsel %vm403, %v378, 0
      %v407 = vsel %vm404, %v379, 0
      %v408 = vsel %vm402, %v380, 0
      %v409 = vsel %vm403, %v381, 0
      %v410 = vsel %vm404, %v382, 0
      %v411 = vsel %vm402, %v383, 0
      %v412 = vsel %vm403, %v384, 0
      %v413 = vsel %vm404, %v385, 0
      %423 = vrot.lane.b32.xlu0 %v405, 17
      %v424 = vpop.permute.xlu0 %423
      %425 = vrot.lane.b32.xlu0 %v406, 17
      %v426 = vpop.permute.xlu0 %425
      %427 = vrot.lane.b32.xlu0 %v407, 17
      %v428 = vpop.permute.xlu0 %427
      %429 = vrot.lane.b32.xlu0 %v408, 17
      %v430 = vpop.permute.xlu0 %429
      %431 = vrot.lane.b32.xlu0 %v409, 17
      %v432 = vpop.permute.xlu0 %431
      %433 = vrot.lane.b32.xlu0 %v410, 17
      %v434 = vpop.permute.xlu0 %433
      %435 = vrot.lane.b32.xlu0 %v411, 17
      %v436 = vpop.permute.xlu0 %435
      %437 = vrot.lane.b32.xlu0 %v412, 17
      %v438 = vpop.permute.xlu0 %437
      %439 = vrot.lane.b32.xlu0 %v413, 17
      %v440 = vpop.permute.xlu0 %439
      %vm441 = vcmask 138240
      %v442 = vsel %vm441, %v424, %v426
      %v443 = vsel %vm441, %v426, %v428
      %v444 = vsel %vm441, %v430, %v432
      %v445 = vsel %vm441, %v432, %v434
      %v446 = vsel %vm441, %v436, %v438
      %v447 = vsel %vm441, %v438, %v440
      %454 = vst [vmem:[#allocation3] sm:$0xff] %v442
      %455 = vst [vmem:[#allocation3 + $0x8] sm:$0xff] %v443
      %456 = vst [vmem:[#allocation3 + $0x10] sm:$0xff] %v444
      %457 = vst [vmem:[#allocation3 + $0x18] sm:$0xff] %v445
      %458 = vst [vmem:[#allocation3 + $0x20] sm:$0xff] %v446
      %459 = vst [vmem:[#allocation3 + $0x28] sm:$0xff] %v447
      %v460 = vld [vmem:[#allocation2] sm:$0xff]
      %v461 = vld [vmem:[#allocation2 + $0x8] sm:$0xff]
      %v462 = vld [vmem:[#allocation2 + $0x10] sm:$0xff]
      %v463 = vld [vmem:[#allocation2 + $0x20] sm:$0xff]
      %v464 = vld [vmem:[#allocation2 + $0x28] sm:$0xff]
      %v465 = vld [vmem:[#allocation2 + $0x30] sm:$0xff]
      %v466 = vld [vmem:[#allocation2 + $0x40] sm:$0xff]
      %v467 = vld [vmem:[#allocation2 + $0x48] sm:$0xff]
      %v468 = vld [vmem:[#allocation2 + $0x50] sm:$0xff]
      %478 = vrot.lane.b32.xlu0 %v460, 16
      %v479 = vpop.permute.xlu0 %478
      %480 = vrot.lane.b32.xlu0 %v461, 16
      %v481 = vpop.permute.xlu0 %480
      %482 = vrot.lane.b32.xlu0 %v462, 16
      %v483 = vpop.permute.xlu0 %482
      %484 = vrot.lane.b32.xlu0 %v463, 16
      %v485 = vpop.permute.xlu0 %484
      %486 = vrot.lane.b32.xlu0 %v464, 16
      %v487 = vpop.permute.xlu0 %486
      %488 = vrot.lane.b32.xlu0 %v465, 16
      %v489 = vpop.permute.xlu0 %488
      %490 = vrot.lane.b32.xlu0 %v466, 16
      %v491 = vpop.permute.xlu0 %490
      %492 = vrot.lane.b32.xlu0 %v467, 16
      %v493 = vpop.permute.xlu0 %492
      %494 = vrot.lane.b32.xlu0 %v468, 16
      %v495 = vpop.permute.xlu0 %494
      %vm496 = vcmask 130048
      %v497 = vsel %vm496, %v479, %v481
      %v498 = vsel %vm496, %v481, %v483
      %v499 = vsel %vm496, %v485, %v487
      %v500 = vsel %vm496, %v487, %v489
      %v501 = vsel %vm496, %v491, %v493
      %v502 = vsel %vm496, %v493, %v495
      %509 = vst [vmem:[#allocation3 + $0x30] sm:$0xff] %v497
      %510 = vst [vmem:[#allocation3 + $0x38] sm:$0xff] %v498
      %511 = vst [vmem:[#allocation3 + $0x40] sm:$0xff] %v499
      %512 = vst [vmem:[#allocation3 + $0x48] sm:$0xff] %v500
      %513 = vst [vmem:[#allocation3 + $0x50] sm:$0xff] %v501
      %514 = vst [vmem:[#allocation3 + $0x58] sm:$0xff] %v502
      %v515 = vld [vmem:[#allocation2] sm:$0xff]
      %v516 = vld [vmem:[#allocation2 + $0x8] sm:$0xff]
      %v517 = vld [vmem:[#allocation2 + $0x10] sm:$0xff]
      %v518 = vld [vmem:[#allocation2 + $0x20] sm:$0xff]
      %v519 = vld [vmem:[#allocation2 + $0x28] sm:$0xff]
      %v520 = vld [vmem:[#allocation2 + $0x30] sm:$0xff]
      %v521 = vld [vmem:[#allocation2 + $0x40] sm:$0xff]
      %v522 = vld [vmem:[#allocation2 + $0x48] sm:$0xff]
      %v523 = vld [vmem:[#allocation2 + $0x50] sm:$0xff]
      %vm524 = vmpackc.low %vm376, %vm375
      %v525 = vsel %vm524, 65537, 0
      %v526 = vlaneseq
      %v527 = vshrl.u32 %v526, 7
      %v528 = vsub.s32 0, %v527
      %v529 = vrot.slane %v525, %v528
      %v530 = vlaneseq
      %v531 = vshrl.u32 %v530, 7
      %v532 = vsub.s32 4, %v531
      %v533 = vrot.slane %v525, %v532
      %534 = vrot.lane.b32.xlu0 %v529, 113
      %v535 = vpop.permute.xlu0 %534
      %536 = vrot.lane.b32.xlu0 %v533, 113
      %v537 = vpop.permute.xlu0 %536
      %vm538 = vcmask 924672
      %v539 = vsel %vm538, %v535, %v537
      %vm540 = vcmp.ne.s16.totalorder %v535, 0
      %vm541 = vcmp.ne.s16.totalorder %v539, 0
      %vm542 = vcmp.ne.s16.totalorder %v537, 0
      %v543 = vsel %vm540, %v515, 0
      %v544 = vsel %vm541, %v516, 0
      %v545 = vsel %vm542, %v517, 0
      %v546 = vsel %vm540, %v518, 0
      %v547 = vsel %vm541, %v519, 0
      %v548 = vsel %vm542, %v520, 0
      %v549 = vsel %vm540, %v521, 0
      %v550 = vsel %vm541, %v522, 0
      %v551 = vsel %vm542, %v523, 0
      %561 = vrot.lane.b32.xlu0 %v543, 15
      %v562 = vpop.permute.xlu0 %561
      %563 = vrot.lane.b32.xlu0 %v544, 15
      %v564 = vpop.permute.xlu0 %563
      %565 = vrot.lane.b32.xlu0 %v545, 15
      %v566 = vpop.permute.xlu0 %565
      %567 = vrot.lane.b32.xlu0 %v546, 15
      %v568 = vpop.permute.xlu0 %567
      %569 = vrot.lane.b32.xlu0 %v547, 15
      %v570 = vpop.permute.xlu0 %569
      %571 = vrot.lane.b32.xlu0 %v548, 15
      %v572 = vpop.permute.xlu0 %571
      %573 = vrot.lane.b32.xlu0 %v549, 15
      %v574 = vpop.permute.xlu0 %573
      %575 = vrot.lane.b32.xlu0 %v550, 15
      %v576 = vpop.permute.xlu0 %575
      %577 = vrot.lane.b32.xlu0 %v551, 15
      %v578 = vpop.permute.xlu0 %577
      %vm579 = vcmask 121856
      %v580 = vsel %vm579, %v562, %v564
      %v581 = vsel %vm579, %v564, %v566
      %v582 = vsel %vm579, %v568, %v570
      %v583 = vsel %vm579, %v570, %v572
      %v584 = vsel %vm579, %v574, %v576
      %v585 = vsel %vm579, %v576, %v578
      %592 = vst [vmem:[#allocation3 + $0x60] sm:$0xff] %v580
      %593 = vst [vmem:[#allocation3 + $0x68] sm:$0xff] %v581
      %594 = vst [vmem:[#allocation3 + $0x70] sm:$0xff] %v582
      %595 = vst [vmem:[#allocation3 + $0x78] sm:$0xff] %v583
      %596 = vst [vmem:[#allocation3 + $0x80] sm:$0xff] %v584
      %597 = vst [vmem:[#allocation3 + $0x88] sm:$0xff] %v585
      %v598 = vld [vmem:[#allocation2] sm:$0xff]
      %v599 = vld [vmem:[#allocation2 + $0x8] sm:$0xff]
      %v600 = vld [vmem:[#allocation2 + $0x10] sm:$0xff]
      %v601 = vld [vmem:[#allocation2 + $0x20] sm:$0xff]
      %v602 = vld [vmem:[#allocation2 + $0x28] sm:$0xff]
      %v603 = vld [vmem:[#allocation2 + $0x30] sm:$0xff]
      %v604 = vld [vmem:[#allocation2 + $0x40] sm:$0xff]
      %v605 = vld [vmem:[#allocation2 + $0x48] sm:$0xff]
      %v606 = vld [vmem:[#allocation2 + $0x50] sm:$0xff]
      %607 = vrot.lane.b32.xlu0 %v391, 127
      %v608 = vpop.permute.xlu0 %607
      %609 = vrot.lane.b32.xlu0 %v395, 127
      %v610 = vpop.permute.xlu0 %609
      %vm611 = vcmask 1039360
      %v612 = vsel %vm611, %v608, %v610
      %vm613 = vcmp.ne.s16.totalorder %v608, 0
      %vm614 = vcmp.ne.s16.totalorder %v612, 0
      %vm615 = vcmp.ne.s16.totalorder %v610, 0
      %v616 = vsel %vm613, %v598, 0
      %v617 = vsel %vm614, %v599, 0
      %v618 = vsel %vm615, %v600, 0
      %v619 = vsel %vm613, %v601, 0
      %v620 = vsel %vm614, %v602, 0
      %v621 = vsel %vm615, %v603, 0
      %v622 = vsel %vm613, %v604, 0
      %v623 = vsel %vm614, %v605, 0
      %v624 = vsel %vm615, %v606, 0
      %634 = vrot.lane.b32.xlu0 %v616, 1
      %v635 = vpop.permute.xlu0 %634
      %636 = vrot.lane.b32.xlu0 %v617, 1
      %v637 = vpop.permute.xlu0 %636
      %638 = vrot.lane.b32.xlu0 %v618, 1
      %v639 = vpop.permute.xlu0 %638
      %640 = vrot.lane.b32.xlu0 %v619, 1
      %v641 = vpop.permute.xlu0 %640
      %642 = vrot.lane.b32.xlu0 %v620, 1
      %v643 = vpop.permute.xlu0 %642
      %644 = vrot.lane.b32.xlu0 %v621, 1
      %v645 = vpop.permute.xlu0 %644
      %646 = vrot.lane.b32.xlu0 %v622, 1
      %v647 = vpop.permute.xlu0 %646
      %648 = vrot.lane.b32.xlu0 %v623, 1
      %v649 = vpop.permute.xlu0 %648
      %650 = vrot.lane.b32.xlu0 %v624, 1
      %v651 = vpop.permute.xlu0 %650
      %vm652 = vcmask 7168
      %v653 = vsel %vm652, %v635, %v637
      %v654 = vsel %vm652, %v637, %v639
      %v655 = vsel %vm652, %v641, %v643
      %v656 = vsel %vm652, %v643, %v645
      %v657 = vsel %vm652, %v647, %v649
      %v658 = vsel %vm652, %v649, %v651
      %665 = vst [vmem:[#allocation3 + $0x90] sm:$0xff] %v653
      %666 = vst [vmem:[#allocation3 + $0x98] sm:$0xff] %v654
      %667 = vst [vmem:[#allocation3 + $0xa0] sm:$0xff] %v655
      %668 = vst [vmem:[#allocation3 + $0xa8] sm:$0xff] %v656
      %669 = vst [vmem:[#allocation3 + $0xb0] sm:$0xff] %v657
      %670 = vst [vmem:[#allocation3 + $0xb8] sm:$0xff] %v658
      %v671 = vld [vmem:[#allocation2 + $0x8] sm:$0xff]
      %v672 = vld [vmem:[#allocation2 + $0x10] sm:$0xff]
      %v673 = vld [vmem:[#allocation2 + $0x28] sm:$0xff]
      %v674 = vld [vmem:[#allocation2 + $0x30] sm:$0xff]
      %v675 = vld [vmem:[#allocation2 + $0x48] sm:$0xff]
      %v676 = vld [vmem:[#allocation2 + $0x50] sm:$0xff]
      %677 = vst [vmem:[#allocation3 + $0xc0] sm:$0xff] %v671
      %678 = vst [vmem:[#allocation3 + $0xc8] sm:$0xff] %v672
      %679 = vst [vmem:[#allocation3 + $0xd0] sm:$0xff] %v673
      %680 = vst [vmem:[#allocation3 + $0xd8] sm:$0xff] %v674
      %681 = vst [vmem:[#allocation3 + $0xe0] sm:$0xff] %v675
      %682 = vst [vmem:[#allocation3 + $0xe8] sm:$0xff] %v676
      %v683 = vld [vmem:[#allocation2 + $0x8] sm:$0xff]
      %v684 = vld [vmem:[#allocation2 + $0x10] sm:$0xff]
      %v685 = vld [vmem:[#allocation2 + $0x18] sm:$0xff]
      %v686 = vld [vmem:[#allocation2 + $0x28] sm:$0xff]
      %v687 = vld [vmem:[#allocation2 + $0x30] sm:$0xff]
      %v688 = vld [vmem:[#allocation2 + $0x38] sm:$0xff]
      %v689 = vld [vmem:[#allocation2 + $0x48] sm:$0xff]
      %v690 = vld [vmem:[#allocation2 + $0x50] sm:$0xff]
      %v691 = vld [vmem:[#allocation2 + $0x58] sm:$0xff]
      %692 = vrot.lane.b32.xlu0 %v529, 1
      %v693 = vpop.permute.xlu0 %692
      %694 = vrot.lane.b32.xlu0 %v533, 1
      %v695 = vpop.permute.xlu0 %694
      %v696 = vsel %vm652, %v693, %v695
      %vm697 = vcmp.ne.s16.totalorder %v693, 0
      %vm698 = vcmp.ne.s16.totalorder %v696, 0
      %vm699 = vcmp.ne.s16.totalorder %v695, 0
      %v700 = vsel %vm697, %v683, 0
      %v701 = vsel %vm698, %v684, 0
      %v702 = vsel %vm699, %v685, 0
      %v703 = vsel %vm697, %v686, 0
      %v704 = vsel %vm698, %v687, 0
      %v705 = vsel %vm699, %v688, 0
      %v706 = vsel %vm697, %v689, 0
      %v707 = vsel %vm698, %v690, 0
      %v708 = vsel %vm699, %v691, 0
      %718 = vrot.lane.b32.xlu0 %v700, 127
      %v719 = vpop.permute.xlu0 %718
      %720 = vrot.lane.b32.xlu0 %v701, 127
      %v721 = vpop.permute.xlu0 %720
      %722 = vrot.lane.b32.xlu0 %v702, 127
      %v723 = vpop.permute.xlu0 %722
      %724 = vrot.lane.b32.xlu0 %v703, 127
      %v725 = vpop.permute.xlu0 %724
      %726 = vrot.lane.b32.xlu0 %v704, 127
      %v727 = vpop.permute.xlu0 %726
      %728 = vrot.lane.b32.xlu0 %v705, 127
      %v729 = vpop.permute.xlu0 %728
      %730 = vrot.lane.b32.xlu0 %v706, 127
      %v731 = vpop.permute.xlu0 %730
      %732 = vrot.lane.b32.xlu0 %v707, 127
      %v733 = vpop.permute.xlu0 %732
      %734 = vrot.lane.b32.xlu0 %v708, 127
      %v735 = vpop.permute.xlu0 %734
      %v736 = vsel %vm611, %v719, %v721
      %v737 = vsel %vm611, %v721, %v723
      %v738 = vsel %vm611, %v725, %v727
      %v739 = vsel %vm611, %v727, %v729
      %v740 = vsel %vm611, %v731, %v733
      %v741 = vsel %vm611, %v733, %v735
      %748 = vst [vmem:[#allocation3 + $0xf0] sm:$0xff] %v736
      %749 = vst [vmem:[#allocation3 + $0xf8] sm:$0xff] %v737
      %750 = vst [vmem:[#allocation3 + $0x100] sm:$0xff] %v738
      %751 = vst [vmem:[#allocation3 + $0x108] sm:$0xff] %v739
      %752 = vst [vmem:[#allocation3 + $0x110] sm:$0xff] %v740
      %753 = vst [vmem:[#allocation3 + $0x118] sm:$0xff] %v741
      %v754 = vld [vmem:[#allocation2 + $0x8] sm:$0xff]
      %v755 = vld [vmem:[#allocation2 + $0x10] sm:$0xff]
      %v756 = vld [vmem:[#allocation2 + $0x18] sm:$0xff]
      %v757 = vld [vmem:[#allocation2 + $0x28] sm:$0xff]
      %v758 = vld [vmem:[#allocation2 + $0x30] sm:$0xff]
      %v759 = vld [vmem:[#allocation2 + $0x38] sm:$0xff]
      %v760 = vld [vmem:[#allocation2 + $0x48] sm:$0xff]
      %v761 = vld [vmem:[#allocation2 + $0x50] sm:$0xff]
      %v762 = vld [vmem:[#allocation2 + $0x58] sm:$0xff]
      %763 = vrot.lane.b32.xlu0 %v391, 15
      %v764 = vpop.permute.xlu0 %763
      %765 = vrot.lane.b32.xlu0 %v395, 15
      %v766 = vpop.permute.xlu0 %765
      %v767 = vsel %vm579, %v764, %v766
      %vm768 = vcmp.ne.s16.totalorder %v764, 0
      %vm769 = vcmp.ne.s16.totalorder %v767, 0
      %vm770 = vcmp.ne.s16.totalorder %v766, 0
      %v771 = vsel %vm768, %v754, 0
      %v772 = vsel %vm769, %v755, 0
      %v773 = vsel %vm770, %v756, 0
      %v774 = vsel %vm768, %v757, 0
      %v775 = vsel %vm769, %v758, 0
      %v776 = vsel %vm770, %v759, 0
      %v777 = vsel %vm768, %v760, 0
      %v778 = vsel %vm769, %v761, 0
      %v779 = vsel %vm770, %v762, 0
      %789 = vrot.lane.b32.xlu0 %v771, 113
      %v790 = vpop.permute.xlu0 %789
      %791 = vrot.lane.b32.xlu0 %v772, 113
      %v792 = vpop.permute.xlu0 %791
      %793 = vrot.lane.b32.xlu0 %v773, 113
      %v794 = vpop.permute.xlu0 %793
      %795 = vrot.lane.b32.xlu0 %v774, 113
      %v796 = vpop.permute.xlu0 %795
      %797 = vrot.lane.b32.xlu0 %v775, 113
      %v798 = vpop.permute.xlu0 %797
      %799 = vrot.lane.b32.xlu0 %v776, 113
      %v800 = vpop.permute.xlu0 %799
      %801 = vrot.lane.b32.xlu0 %v777, 113
      %v802 = vpop.permute.xlu0 %801
      %803 = vrot.lane.b32.xlu0 %v778, 113
      %v804 = vpop.permute.xlu0 %803
      %805 = vrot.lane.b32.xlu0 %v779, 113
      %v806 = vpop.permute.xlu0 %805
      %v807 = vsel %vm538, %v790, %v792
      %v808 = vsel %vm538, %v792, %v794
      %v809 = vsel %vm538, %v796, %v798
      %v810 = vsel %vm538, %v798, %v800
      %v811 = vsel %vm538, %v802, %v804
      %v812 = vsel %vm538, %v804, %v806
      %819 = vst [vmem:[#allocation3 + $0x120] sm:$0xff] %v807
      %820 = vst [vmem:[#allocation3 + $0x128] sm:$0xff] %v808
      %821 = vst [vmem:[#allocation3 + $0x130] sm:$0xff] %v809
      %822 = vst [vmem:[#allocation3 + $0x138] sm:$0xff] %v810
      %823 = vst [vmem:[#allocation3 + $0x140] sm:$0xff] %v811
      %824 = vst [vmem:[#allocation3 + $0x148] sm:$0xff] %v812
      %v825 = vld [vmem:[#allocation2 + $0x8] sm:$0xff]
      %v826 = vld [vmem:[#allocation2 + $0x10] sm:$0xff]
      %v827 = vld [vmem:[#allocation2 + $0x18] sm:$0xff]
      %v828 = vld [vmem:[#allocation2 + $0x28] sm:$0xff]
      %v829 = vld [vmem:[#allocation2 + $0x30] sm:$0xff]
      %v830 = vld [vmem:[#allocation2 + $0x38] sm:$0xff]
      %v831 = vld [vmem:[#allocation2 + $0x48] sm:$0xff]
      %v832 = vld [vmem:[#allocation2 + $0x50] sm:$0xff]
      %v833 = vld [vmem:[#allocation2 + $0x58] sm:$0xff]
      %843 = vrot.lane.b32.xlu0 %v825, 112
      %v844 = vpop.permute.xlu0 %843
      %845 = vrot.lane.b32.xlu0 %v826, 112
      %v846 = vpop.permute.xlu0 %845
      %847 = vrot.lane.b32.xlu0 %v827, 112
      %v848 = vpop.permute.xlu0 %847
      %849 = vrot.lane.b32.xlu0 %v828, 112
      %v850 = vpop.permute.xlu0 %849
      %851 = vrot.lane.b32.xlu0 %v829, 112
      %v852 = vpop.permute.xlu0 %851
      %853 = vrot.lane.b32.xlu0 %v830, 112
      %v854 = vpop.permute.xlu0 %853
      %855 = vrot.lane.b32.xlu0 %v831, 112
      %v856 = vpop.permute.xlu0 %855
      %857 = vrot.lane.b32.xlu0 %v832, 112
      %v858 = vpop.permute.xlu0 %857
      %859 = vrot.lane.b32.xlu0 %v833, 112
      %v860 = vpop.permute.xlu0 %859
      %vm861 = vcmask 916480
      %v862 = vsel %vm861, %v844, %v846
      %v863 = vsel %vm861, %v846, %v848
      %v864 = vsel %vm861, %v850, %v852
      %v865 = vsel %vm861, %v852, %v854
      %v866 = vsel %vm861, %v856, %v858
      %v867 = vsel %vm861, %v858, %v860
      %874 = vst [vmem:[#allocation3 + $0x150] sm:$0xff] %v862
      %875 = vst [vmem:[#allocation3 + $0x158] sm:$0xff] %v863
      %876 = vst [vmem:[#allocation3 + $0x160] sm:$0xff] %v864
      %877 = vst [vmem:[#allocation3 + $0x168] sm:$0xff] %v865
      %878 = vst [vmem:[#allocation3 + $0x170] sm:$0xff] %v866
      %879 = vst [vmem:[#allocation3 + $0x178] sm:$0xff] %v867
      %v880 = vld [vmem:[#allocation2 + $0x8] sm:$0xff]
      %v881 = vld [vmem:[#allocation2 + $0x10] sm:$0xff]
      %v882 = vld [vmem:[#allocation2 + $0x18] sm:$0xff]
      %v883 = vld [vmem:[#allocation2 + $0x28] sm:$0xff]
      %v884 = vld [vmem:[#allocation2 + $0x30] sm:$0xff]
      %v885 = vld [vmem:[#allocation2 + $0x38] sm:$0xff]
      %v886 = vld [vmem:[#allocation2 + $0x48] sm:$0xff]
      %v887 = vld [vmem:[#allocation2 + $0x50] sm:$0xff]
      %v888 = vld [vmem:[#allocation2 + $0x58] sm:$0xff]
      %889 = vrot.lane.b32.xlu0 %v529, 17
      %v890 = vpop.permute.xlu0 %889
      %891 = vrot.lane.b32.xlu0 %v533, 17
      %v892 = vpop.permute.xlu0 %891
      %v893 = vsel %vm441, %v890, %v892
      %vm894 = vcmp.ne.s16.totalorder %v890, 0
      %vm895 = vcmp.ne.s16.totalorder %v893, 0
      %vm896 = vcmp.ne.s16.totalorder %v892, 0
      %v897 = vsel %vm894, %v880, 0
      %v898 = vsel %vm895, %v881, 0
      %v899 = vsel %vm896, %v882, 0
      %v900 = vsel %vm894, %v883, 0
      %v901 = vsel %vm895, %v884, 0
      %v902 = vsel %vm896, %v885, 0
      %v903 = vsel %vm894, %v886, 0
      %v904 = vsel %vm895, %v887, 0
      %v905 = vsel %vm896, %v888, 0
      %915 = vrot.lane.b32.xlu0 %v897, 111
      %v916 = vpop.permute.xlu0 %915
      %917 = vrot.lane.b32.xlu0 %v898, 111
      %v918 = vpop.permute.xlu0 %917
      %919 = vrot.lane.b32.xlu0 %v899, 111
      %v920 = vpop.permute.xlu0 %919
      %921 = vrot.lane.b32.xlu0 %v900, 111
      %v922 = vpop.permute.xlu0 %921
      %923 = vrot.lane.b32.xlu0 %v901, 111
      %v924 = vpop.permute.xlu0 %923
      %925 = vrot.lane.b32.xlu0 %v902, 111
      %v926 = vpop.permute.xlu0 %925
      %927 = vrot.lane.b32.xlu0 %v903, 111
      %v928 = vpop.permute.xlu0 %927
      %929 = vrot.lane.b32.xlu0 %v904, 111
      %v930 = vpop.permute.xlu0 %929
      %931 = vrot.lane.b32.xlu0 %v905, 111
      %v932 = vpop.permute.xlu0 %931
      %v933 = vsel %vm400, %v916, %v918
      %v934 = vsel %vm400, %v918, %v920
      %v935 = vsel %vm400, %v922, %v924
      %v936 = vsel %vm400, %v924, %v926
      %v937 = vsel %vm400, %v928, %v930
      %v938 = vsel %vm400, %v930, %v932
      %945 = vst [vmem:[#allocation3 + $0x180] sm:$0xff] %v933
      %946 = vst [vmem:[#allocation3 + $0x188] sm:$0xff] %v934
      %947 = vst [vmem:[#allocation3 + $0x190] sm:$0xff] %v935
      %948 = vst [vmem:[#allocation3 + $0x198] sm:$0xff] %v936
      %949 = vst [vmem:[#allocation3 + $0x1a0] sm:$0xff] %v937
      %950 = vst [vmem:[#allocation3 + $0x1a8] sm:$0xff] %v938
      %v951 = vld [vmem:[%s3] sm:$0xff]
      %v952 = vld [vmem:[%s3 + $0x8] sm:$0xff]
      %v953 = vld [vmem:[%s3 + $0x10] sm:$0xff]
      %v954 = vld [vmem:[%s3 + $0x18] sm:$0xff]
      %v955 = vld [vmem:[%s3 + $0x20] sm:$0xff]
      %v956 = vld [vmem:[%s3 + $0x28] sm:$0xff]
      %v957 = vld [vmem:[%s3 + $0x30] sm:$0xff]
      %v958 = vld [vmem:[%s3 + $0x38] sm:$0xff]
      %v959 = vld [vmem:[%s3 + $0x40] sm:$0xff]
      %v960 = vld [vmem:[%s3 + $0x48] sm:$0xff]
      %v961 = vld [vmem:[%s3 + $0x50] sm:$0xff]
      %v962 = vld [vmem:[%s3 + $0x58] sm:$0xff]
      %v963 = vld [vmem:[%s3 + $0x60] sm:$0xff]
      %v964 = vld [vmem:[%s3 + $0x68] sm:$0xff]
      %v965 = vld [vmem:[%s3 + $0x70] sm:$0xff]
      %v966 = vld [vmem:[%s3 + $0x78] sm:$0xff]
      %v967 = vld [vmem:[%s3 + $0x80] sm:$0xff]
      %v968 = vld [vmem:[%s3 + $0x88] sm:$0xff]
      %v969 = vld [vmem:[%s3 + $0x90] sm:$0xff]
      %v970 = vld [vmem:[%s3 + $0x98] sm:$0xff]
      %v971 = vld [vmem:[%s3 + $0xa0] sm:$0xff]
      %v972 = vld [vmem:[%s3 + $0xa8] sm:$0xff]
      %v973 = vld [vmem:[%s3 + $0xb0] sm:$0xff]
      %v974 = vld [vmem:[%s3 + $0xb8] sm:$0xff]
      %v975 = vld [vmem:[%s3 + $0xc0] sm:$0xff]
      %v976 = vld [vmem:[%s3 + $0xc8] sm:$0xff]
      %v977 = vld [vmem:[%s3 + $0xd0] sm:$0xff]
      %v978 = vld [vmem:[%s3 + $0xd8] sm:$0xff]
      %v979 = vld [vmem:[%s3 + $0xe0] sm:$0xff]
      %v980 = vld [vmem:[%s3 + $0xe8] sm:$0xff]
      %v981 = vld [vmem:[%s3 + $0xf0] sm:$0xff]
      %v982 = vld [vmem:[%s3 + $0xf8] sm:$0xff]
      %v983 = vld [vmem:[#allocation3] sm:$0xff]
      %v984 = vld [vmem:[#allocation3 + $0x10] sm:$0xff]
      %v985 = vld [vmem:[#allocation3 + $0x20] sm:$0xff]
      %v986 = vld [vmem:[#allocation3 + $0x30] sm:$0xff]
      %v987 = vld [vmem:[#allocation3 + $0x40] sm:$0xff]
      %v988 = vld [vmem:[#allocation3 + $0x50] sm:$0xff]
      %v989 = vld [vmem:[#allocation3 + $0x60] sm:$0xff]
      %v990 = vld [vmem:[#allocation3 + $0x70] sm:$0xff]
      %v991 = vld [vmem:[#allocation3 + $0x80] sm:$0xff]
      %v992 = vld [vmem:[#allocation3 + $0x90] sm:$0xff]
      %v993 = vld [vmem:[#allocation3 + $0xa0] sm:$0xff]
      %v994 = vld [vmem:[#allocation3 + $0xb0] sm:$0xff]
      %v995 = vld [vmem:[#allocation3 + $0xc0] sm:$0xff]
      %v996 = vld [vmem:[#allocation3 + $0xd0] sm:$0xff]
      %v997 = vld [vmem:[#allocation3 + $0xe0] sm:$0xff]
      %v998 = vld [vmem:[#allocation3 + $0xf0] sm:$0xff]
      %v999 = vld [vmem:[#allocation3 + $0x100] sm:$0xff]
      %v1000 = vld [vmem:[#allocation3 + $0x110] sm:$0xff]
      %v1001 = vld [vmem:[#allocation3 + $0x120] sm:$0xff]
      %v1002 = vld [vmem:[#allocation3 + $0x130] sm:$0xff]
      %v1003 = vld [vmem:[#allocation3 + $0x140] sm:$0xff]
      %v1004 = vld [vmem:[#allocation3 + $0x150] sm:$0xff]
      %v1005 = vld [vmem:[#allocation3 + $0x160] sm:$0xff]
      %v1006 = vld [vmem:[#allocation3 + $0x170] sm:$0xff]
      %v1007 = vld [vmem:[#allocation3 + $0x180] sm:$0xff]
      %v1008 = vld [vmem:[#allocation3 + $0x190] sm:$0xff]
      %v1009 = vld [vmem:[#allocation3 + $0x1a0] sm:$0xff]
      %v1042 = vunpack.c.l.b16 %v951
      %v1043 = vunpack.c.h.b16 %v951
      %v1044 = vunpack.c.l.b16 %v952
      %v1045 = vunpack.c.h.b16 %v952
      %v1046 = vunpack.c.l.b16 %v953
      %v1047 = vunpack.c.h.b16 %v953
      %v1048 = vunpack.c.l.b16 %v954
      %v1049 = vunpack.c.h.b16 %v954
      %v1050 = vunpack.c.l.b16 %v955
      %v1051 = vunpack.c.h.b16 %v955
      %v1052 = vunpack.c.l.b16 %v956
      %v1053 = vunpack.c.h.b16 %v956
      %v1054 = vunpack.c.l.b16 %v957
      %v1055 = vunpack.c.h.b16 %v957
      %v1056 = vunpack.c.l.b16 %v958
      %v1057 = vunpack.c.h.b16 %v958
      %v1058 = vunpack.c.l.b16 %v959
      %v1059 = vunpack.c.h.b16 %v959
      %v1060 = vunpack.c.l.b16 %v960
      %v1061 = vunpack.c.h.b16 %v960
      %v1062 = vunpack.c.l.b16 %v961
      %v1063 = vunpack.c.h.b16 %v961
      %v1064 = vunpack.c.l.b16 %v962
      %v1065 = vunpack.c.h.b16 %v962
      %v1066 = vunpack.c.l.b16 %v963
      %v1067 = vunpack.c.h.b16 %v963
      %v1068 = vunpack.c.l.b16 %v964
      %v1069 = vunpack.c.h.b16 %v964
      %v1070 = vunpack.c.l.b16 %v965
      %v1071 = vunpack.c.h.b16 %v965
      %v1072 = vunpack.c.l.b16 %v966
      %v1073 = vunpack.c.h.b16 %v966
      %v1074 = vunpack.c.l.b16 %v967
      %v1075 = vunpack.c.h.b16 %v967
      %v1076 = vunpack.c.l.b16 %v968
      %v1077 = vunpack.c.h.b16 %v968
      %v1078 = vunpack.c.l.b16 %v969
      %v1079 = vunpack.c.h.b16 %v969
      %v1080 = vunpack.c.l.b16 %v970
      %v1081 = vunpack.c.h.b16 %v970
      %v1082 = vunpack.c.l.b16 %v971
      %v1083 = vunpack.c.h.b16 %v971
      %v1084 = vunpack.c.l.b16 %v972
      %v1085 = vunpack.c.h.b16 %v972
      %v1086 = vunpack.c.l.b16 %v973
      %v1087 = vunpack.c.h.b16 %v973
      %v1088 = vunpack.c.l.b16 %v974
      %v1089 = vunpack.c.h.b16 %v974
      %v1090 = vunpack.c.l.b16 %v975
      %v1091 = vunpack.c.h.b16 %v975
      %v1092 = vunpack.c.l.b16 %v976
      %v1093 = vunpack.c.h.b16 %v976
      %v1094 = vunpack.c.l.b16 %v977
      %v1095 = vunpack.c.h.b16 %v977
      %v1096 = vunpack.c.l.b16 %v978
      %v1097 = vunpack.c.h.b16 %v978
      %v1098 = vunpack.c.l.b16 %v979
      %v1099 = vunpack.c.h.b16 %v979
      %v1100 = vunpack.c.l.b16 %v980
      %v1101 = vunpack.c.h.b16 %v980
      %v1102 = vunpack.c.l.b16 %v981
      %v1103 = vunpack.c.h.b16 %v981
      %v1104 = vunpack.c.l.b16 %v982
      %v1105 = vunpack.c.h.b16 %v982
      %v1106 = vpack.c.b16 %v1046, %v1042
      %v1107 = vpack.c.b16 %v1047, %v1043
      %v1108 = vpack.c.b16 %v1048, %v1044
      %v1109 = vpack.c.b16 %v1049, %v1045
      %v1110 = vpack.c.b16 %v1054, %v1050
      %v1111 = vpack.c.b16 %v1055, %v1051
      %v1112 = vpack.c.b16 %v1056, %v1052
      %v1113 = vpack.c.b16 %v1057, %v1053
      %v1114 = vpack.c.b16 %v1062, %v1058
      %v1115 = vpack.c.b16 %v1063, %v1059
      %v1116 = vpack.c.b16 %v1064, %v1060
      %v1117 = vpack.c.b16 %v1065, %v1061
      %v1118 = vpack.c.b16 %v1070, %v1066
      %v1119 = vpack.c.b16 %v1071, %v1067
      %v1120 = vpack.c.b16 %v1072, %v1068
      %v1121 = vpack.c.b16 %v1073, %v1069
      %v1122 = vpack.c.b16 %v1078, %v1074
      %v1123 = vpack.c.b16 %v1079, %v1075
      %v1124 = vpack.c.b16 %v1080, %v1076
      %v1125 = vpack.c.b16 %v1081, %v1077
      %v1126 = vpack.c.b16 %v1086, %v1082
      %v1127 = vpack.c.b16 %v1087, %v1083
      %v1128 = vpack.c.b16 %v1088, %v1084
      %v1129 = vpack.c.b16 %v1089, %v1085
      %v1130 = vpack.c.b16 %v1094, %v1090
      %v1131 = vpack.c.b16 %v1095, %v1091
      %v1132 = vpack.c.b16 %v1096, %v1092
      %v1133 = vpack.c.b16 %v1097, %v1093
      %v1134 = vpack.c.b16 %v1102, %v1098
      %v1135 = vpack.c.b16 %v1103, %v1099
      %v1136 = vpack.c.b16 %v1104, %v1100
      %v1137 = vpack.c.b16 %v1105, %v1101
      %vm1162 = vcmask 392192
      %v1164 = vsel %vm1162, %v1109, 0
      %v1167 = vsel %vm1162, %v1113, 0
      %v1170 = vsel %vm1162, %v1117, 0
      %v1173 = vsel %vm1162, %v1121, 0
      %v1176 = vsel %vm1162, %v1125, 0
      %v1179 = vsel %vm1162, %v1129, 0
      %v1182 = vsel %vm1162, %v1133, 0
      %v1185 = vsel %vm1162, %v1137, 0
      %1187 = vmatprep.subr.bf16.mxu0 0
      %1188 = vmatpush1.bf16.msra.mxu0 %v983
      %1189 = vmatprep.subr.bf16.mxu0 0
      %1190 = vmatpush1.bf16.msra.mxu0 %v984
      %1191 = vmatprep.subr.bf16.mxu0 0
      %1192 = vmatpush1.bf16.msra.mxu0 %v985
      %1193 = vmatprep.subr.bf16.mxu0 0
      %1194 = vmatpush1.bf16.msra.mxu0 %v986
      %1195 = vmatprep.subr.bf16.mxu0 0
      %1196 = vmatpush1.bf16.msra.mxu0 %v987
      %1197 = vmatprep.subr.bf16.mxu0 0
      %1198 = vmatpush1.bf16.msra.mxu0 %v988
      %1199 = vmatprep.subr.bf16.mxu0 0
      %1200 = vmatpush1.bf16.msra.mxu0 %v989
      %1201 = vmatprep.subr.bf16.mxu0 0
      %1202 = vmatpush1.bf16.msra.mxu0 %v990
      %1203 = vmatprep.subr.bf16.mxu0 0
      %1204 = vmatpush1.bf16.msra.mxu0 %v991
      %1205 = vmatprep.subr.bf16.mxu0 0
      %1206 = vmatpush1.bf16.msra.mxu0 %v992
      %1207 = vmatprep.subr.bf16.mxu0 0
      %1208 = vmatpush1.bf16.msra.mxu0 %v993
      %1209 = vmatprep.subr.bf16.mxu0 0
      %1210 = vmatpush1.bf16.msra.mxu0 %v994
      %1211 = vmatprep.subr.bf16.mxu0 0
      %1212 = vmatpush1.bf16.msra.mxu0 %v995
      %1213 = vmatprep.subr.bf16.mxu0 0
      %1214 = vmatpush1.bf16.msra.mxu0 %v996
      %1215 = vmatprep.subr.bf16.mxu0 0
      %1216 = vmatpush1.bf16.msra.mxu0 %v997
      %1217 = vmatprep.subr.bf16.mxu0 0
      %1218 = vmatpush1.bf16.msra.mxu0 %v998
      %1219 = vmatprep.mubr.bf16.mxu0 %v1107
      %1220 = vmatmul.mubr.bf16.gmra.mrb[0].mxu0 %v1106
      %v1221 = vpop.f32.mrb[0].mxu0
      %v1222 = vadd.f32 0.0, %v1221
      %v1223 = vpop.f32.mrb[0].mxu0
      %v1224 = vpop.f32.mrb[0].mxu0
      %v1225 = vadd.f32 0.0, %v1224
      %v1226 = vpop.f32.mrb[0].mxu0
      %1227 = vmatprep.mubr.bf16.mxu0 %v1111
      %1228 = vmatmul.mubr.bf16.gmra.mrb[0].mxu0 %v1110
      %v1229 = vpop.f32.mrb[0].mxu0
      %v1230 = vadd.f32 0.0, %v1229
      %v1231 = vpop.f32.mrb[0].mxu0
      %v1232 = vpop.f32.mrb[0].mxu0
      %v1233 = vadd.f32 0.0, %v1232
      %v1234 = vpop.f32.mrb[0].mxu0
      %1235 = vmatprep.mubr.bf16.mxu0 %v1115
      %1236 = vmatmul.mubr.bf16.gmra.mrb[0].mxu0 %v1114
      %v1237 = vpop.f32.mrb[0].mxu0
      %v1238 = vadd.f32 0.0, %v1237
      %v1239 = vpop.f32.mrb[0].mxu0
      %v1240 = vpop.f32.mrb[0].mxu0
      %v1241 = vadd.f32 0.0, %v1240
      %v1242 = vpop.f32.mrb[0].mxu0
      %1243 = vmatprep.mubr.bf16.mxu0 %v1119
      %1244 = vmatmul.mubr.bf16.gmra.mrb[0].mxu0 %v1118
      %v1245 = vpop.f32.mrb[0].mxu0
      %v1246 = vadd.f32 0.0, %v1245
      %v1247 = vpop.f32.mrb[0].mxu0
      %v1248 = vpop.f32.mrb[0].mxu0
      %v1249 = vadd.f32 0.0, %v1248
      %v1250 = vpop.f32.mrb[0].mxu0
      %1251 = vmatprep.mubr.bf16.mxu0 %v1123
      %1252 = vmatmul.mubr.bf16.gmra.mrb[0].mxu0 %v1122
      %v1253 = vpop.f32.mrb[0].mxu0
      %v1254 = vadd.f32 0.0, %v1253
      %v1255 = vpop.f32.mrb[0].mxu0
      %v1256 = vpop.f32.mrb[0].mxu0
      %v1257 = vadd.f32 0.0, %v1256
      %v1258 = vpop.f32.mrb[0].mxu0
      %1259 = vmatprep.mubr.bf16.mxu0 %v1127
      %1260 = vmatmul.mubr.bf16.gmra.mrb[0].mxu0 %v1126
      %v1261 = vpop.f32.mrb[0].mxu0
      %v1262 = vadd.f32 0.0, %v1261
      %v1263 = vpop.f32.mrb[0].mxu0
      %v1264 = vpop.f32.mrb[0].mxu0
      %v1265 = vadd.f32 0.0, %v1264
      %v1266 = vpop.f32.mrb[0].mxu0
      %1267 = vmatprep.mubr.bf16.mxu0 %v1131
      %1268 = vmatmul.mubr.bf16.gmra.mrb[0].mxu0 %v1130
      %v1269 = vpop.f32.mrb[0].mxu0
      %v1270 = vadd.f32 0.0, %v1269
      %v1271 = vpop.f32.mrb[0].mxu0
      %v1272 = vpop.f32.mrb[0].mxu0
      %v1273 = vadd.f32 0.0, %v1272
      %v1274 = vpop.f32.mrb[0].mxu0
      %1275 = vmatprep.mubr.bf16.mxu0 %v1135
      %1276 = vmatmul.mubr.bf16.gmra.mrb[0].mxu0 %v1134
      %v1277 = vpop.f32.mrb[0].mxu0
      %v1278 = vadd.f32 0.0, %v1277
      %v1279 = vpop.f32.mrb[0].mxu0
      %v1280 = vpop.f32.mrb[0].mxu0
      %v1281 = vadd.f32 0.0, %v1280
      %v1282 = vpop.f32.mrb[0].mxu0
      %1283 = vdwg.mxu0
      %1284 = vmatprep.subr.bf16.mxu0 0
      %1285 = vmatpush1.bf16.msra.mxu0 %v999
      %1286 = vmatprep.subr.bf16.mxu0 0
      %1287 = vmatpush1.bf16.msra.mxu0 %v1000
      %1288 = vmatprep.subr.bf16.mxu0 0
      %1289 = vmatpush1.bf16.msra.mxu0 %v1001
      %1290 = vmatprep.subr.bf16.mxu0 0
      %1291 = vmatpush1.bf16.msra.mxu0 %v1002
      %1292 = vmatprep.subr.bf16.mxu0 0
      %1293 = vmatpush1.bf16.msra.mxu0 %v1003
      %1294 = vmatprep.subr.bf16.mxu0 0
      %1295 = vmatpush1.bf16.msra.mxu0 %v1004
      %1296 = vmatprep.subr.bf16.mxu0 0
      %1297 = vmatpush1.bf16.msra.mxu0 %v1005
      %1298 = vmatprep.subr.bf16.mxu0 0
      %1299 = vmatpush1.bf16.msra.mxu0 %v1006
      %1300 = vmatprep.subr.bf16.mxu0 0
      %1301 = vmatpush1.bf16.msra.mxu0 %v1007
      %1302 = vmatprep.subr.bf16.mxu0 0
      %1303 = vmatpush1.bf16.msra.mxu0 %v1008
      %1304 = vmatprep.subr.bf16.mxu0 0
      %1305 = vmatpush1.bf16.msra.mxu0 %v1009
      %1306 = vmatprep.subr.bf16.mxu0 0
      %1307 = vmatpush1.bf16.msra.mxu0 0
      %1308 = vmatprep.subr.bf16.mxu0 0
      %1309 = vmatpush1.bf16.msra.mxu0 0
      %1310 = vmatprep.subr.bf16.mxu0 0
      %1311 = vmatpush1.bf16.msra.mxu0 0
      %1312 = vmatprep.subr.bf16.mxu0 0
      %1313 = vmatpush1.bf16.msra.mxu0 0
      %1314 = vmatprep.subr.bf16.mxu0 0
      %1315 = vmatpush1.bf16.msra.mxu0 0
      %1316 = vmatprep.mubr.bf16.mxu0 %v1164
      %1317 = vmatmul.mubr.bf16.gmra.mrb[0].mxu0 %v1108
      %v1318 = vpop.f32.mrb[0].mxu0
      %v1319 = vadd.f32 %v1222, %v1318
      %v1320 = vpop.f32.mrb[0].mxu0
      %v1321 = vpop.f32.mrb[0].mxu0
      %v1322 = vadd.f32 %v1225, %v1321
      %v1323 = vpop.f32.mrb[0].mxu0
      %1324 = vmatprep.mubr.bf16.mxu0 %v1167
      %1325 = vmatmul.mubr.bf16.gmra.mrb[0].mxu0 %v1112
      %v1326 = vpop.f32.mrb[0].mxu0
      %v1327 = vadd.f32 %v1230, %v1326
      %v1328 = vpop.f32.mrb[0].mxu0
      %v1329 = vpop.f32.mrb[0].mxu0
      %v1330 = vadd.f32 %v1233, %v1329
      %v1331 = vpop.f32.mrb[0].mxu0
      %1332 = vmatprep.mubr.bf16.mxu0 %v1170
      %1333 = vmatmul.mubr.bf16.gmra.mrb[0].mxu0 %v1116
      %v1334 = vpop.f32.mrb[0].mxu0
      %v1335 = vadd.f32 %v1238, %v1334
      %v1336 = vpop.f32.mrb[0].mxu0
      %v1337 = vpop.f32.mrb[0].mxu0
      %v1338 = vadd.f32 %v1241, %v1337
      %v1339 = vpop.f32.mrb[0].mxu0
      %1340 = vmatprep.mubr.bf16.mxu0 %v1173
      %1341 = vmatmul.mubr.bf16.gmra.mrb[0].mxu0 %v1120
      %v1342 = vpop.f32.mrb[0].mxu0
      %v1343 = vadd.f32 %v1246, %v1342
      %v1344 = vpop.f32.mrb[0].mxu0
      %v1345 = vpop.f32.mrb[0].mxu0
      %v1346 = vadd.f32 %v1249, %v1345
      %v1347 = vpop.f32.mrb[0].mxu0
      %1348 = vmatprep.mubr.bf16.mxu0 %v1176
      %1349 = vmatmul.mubr.bf16.gmra.mrb[0].mxu0 %v1124
      %v1350 = vpop.f32.mrb[0].mxu0
      %v1351 = vadd.f32 %v1254, %v1350
      %v1352 = vpop.f32.mrb[0].mxu0
      %v1353 = vpop.f32.mrb[0].mxu0
      %v1354 = vadd.f32 %v1257, %v1353
      %v1355 = vpop.f32.mrb[0].mxu0
      %1356 = vmatprep.mubr.bf16.mxu0 %v1179
      %1357 = vmatmul.mubr.bf16.gmra.mrb[0].mxu0 %v1128
      %v1358 = vpop.f32.mrb[0].mxu0
      %v1359 = vadd.f32 %v1262, %v1358
      %v1360 = vpop.f32.mrb[0].mxu0
      %v1361 = vpop.f32.mrb[0].mxu0
      %v1362 = vadd.f32 %v1265, %v1361
      %v1363 = vpop.f32.mrb[0].mxu0
      %1364 = vmatprep.mubr.bf16.mxu0 %v1182
      %1365 = vmatmul.mubr.bf16.gmra.mrb[0].mxu0 %v1132
      %v1366 = vpop.f32.mrb[0].mxu0
      %v1367 = vadd.f32 %v1270, %v1366
      %v1368 = vpop.f32.mrb[0].mxu0
      %v1369 = vpop.f32.mrb[0].mxu0
      %v1370 = vadd.f32 %v1273, %v1369
      %v1371 = vpop.f32.mrb[0].mxu0
      %1372 = vmatprep.mubr.bf16.mxu0 %v1185
      %1373 = vmatmul.mubr.bf16.gmra.mrb[0].mxu0 %v1136
      %v1374 = vpop.f32.mrb[0].mxu0
      %v1375 = vadd.f32 %v1278, %v1374
      %v1376 = vpop.f32.mrb[0].mxu0
      %v1377 = vpop.f32.mrb[0].mxu0
      %v1378 = vadd.f32 %v1281, %v1377
      %v1379 = vpop.f32.mrb[0].mxu0
      %1380 = vdwg.mxu0
      %v1381 = vmul.f32 %v1319, 0.5
      %v1382 = vmul.f32 %v1322, 0.5
      %v1383 = vmul.f32 %v1327, 0.5
      %v1384 = vmul.f32 %v1330, 0.5
      %v1385 = vtanh.pop %v1381
      %v1386 = vtanh.pop %v1382
      %v1387 = vtanh.pop %v1383
      %v1388 = vtanh.pop %v1384
      %v1389 = vmul.f32 %v1385, 0.5
      %v1390 = vmul.f32 %v1386, 0.5
      %v1391 = vmul.f32 %v1387, 0.5
      %v1392 = vmul.f32 %v1388, 0.5
      %v1393 = vadd.f32 %v1389, 0.5
      %v1394 = vadd.f32 %v1390, 0.5
      %v1395 = vadd.f32 %v1391, 0.5
      %v1396 = vadd.f32 %v1392, 0.5
      %v1397 = vmul.f32 %v1335, 0.5
      %v1398 = vmul.f32 %v1338, 0.5
      %v1399 = vmul.f32 %v1343, 0.5
      %v1400 = vmul.f32 %v1346, 0.5
      %v1401 = vtanh.pop %v1397
      %v1402 = vtanh.pop %v1398
      %v1403 = vtanh.pop %v1399
      %v1404 = vtanh.pop %v1400
      %v1405 = vmul.f32 %v1401, 0.5
      %v1406 = vmul.f32 %v1402, 0.5
      %v1407 = vmul.f32 %v1403, 0.5
      %v1408 = vmul.f32 %v1404, 0.5
      %v1409 = vadd.f32 %v1405, 0.5
      %v1410 = vadd.f32 %v1406, 0.5
      %v1411 = vadd.f32 %v1407, 0.5
      %v1412 = vadd.f32 %v1408, 0.5
      %v1413 = vmul.f32 %v1351, 0.5
      %v1414 = vmul.f32 %v1354, 0.5
      %v1415 = vmul.f32 %v1359, 0.5
      %v1416 = vmul.f32 %v1362, 0.5
      %v1417 = vtanh.pop %v1413
      %v1418 = vtanh.pop %v1414
      %v1419 = vtanh.pop %v1415
      %v1420 = vtanh.pop %v1416
      %v1421 = vmul.f32 %v1417, 0.5
      %v1422 = vmul.f32 %v1418, 0.5
      %v1423 = vmul.f32 %v1419, 0.5
      %v1424 = vmul.f32 %v1420, 0.5
      %v1425 = vadd.f32 %v1421, 0.5
      %v1426 = vadd.f32 %v1422, 0.5
      %v1427 = vadd.f32 %v1423, 0.5
      %v1428 = vadd.f32 %v1424, 0.5
      %v1429 = vtanh.pop %v1367
      %v1430 = vtanh.pop %v1370
      %v1431 = vtanh.pop %v1375
      %v1432 = vtanh.pop %v1378
      %v1433 = vld [vmem:[%s267] sm:$0xff]
      %v1434 = vld [vmem:[%s267 + $0x10] sm:$0xff]
      %v1435 = vld [vmem:[%s267 + $0x20] sm:$0xff]
      %v1436 = vld [vmem:[%s267 + $0x30] sm:$0xff]
      %v1437 = vmul.f32 %v1409, %v1433
      %v1438 = vmul.f32 %v1410, %v1434
      %v1439 = vmul.f32 %v1411, %v1435
      %v1440 = vmul.f32 %v1412, %v1436
      %v1441 = vmul.f32 %v1393, %v1429
      %v1442 = vmul.f32 %v1394, %v1430
      %v1443 = vmul.f32 %v1395, %v1431
      %v1444 = vmul.f32 %v1396, %v1432
      %v1445 = vadd.f32 %v1437, %v1441
      %v1446 = vadd.f32 %v1438, %v1442
      %v1447 = vadd.f32 %v1439, %v1443
      %v1448 = vadd.f32 %v1440, %v1444
      %v1449 = vtanh.pop %v1445
      %v1450 = vtanh.pop %v1446
      %v1451 = vtanh.pop %v1447
      %v1452 = vtanh.pop %v1448
      %v1453 = vmul.f32 %v1425, %v1449
      %v1454 = vmul.f32 %v1426, %v1450
      %v1455 = vmul.f32 %v1427, %v1451
      %v1456 = vmul.f32 %v1428, %v1452
      %1457 = vst [vmem:[%s277] sm:$0xff] %v1445
      %1458 = vst [vmem:[%s277 + $0x10] sm:$0xff] %v1446
      %1459 = vst [vmem:[%s277 + $0x20] sm:$0xff] %v1447
      %1460 = vst [vmem:[%s277 + $0x30] sm:$0xff] %v1448
      %1461 = vst [vmem:[%s272] sm:$0xff] %v1453
      %1462 = vst [vmem:[%s272 + $0x10] sm:$0xff] %v1454
      %1463 = vst [vmem:[%s272 + $0x20] sm:$0xff] %v1455
      %1464 = vst [vmem:[%s272 + $0x30] sm:$0xff] %v1456
      %v1465 = vld [vmem:[%s3] sm:$0xff]
      %v1466 = vld [vmem:[%s3 + $0x8] sm:$0xff]
      %v1467 = vld [vmem:[%s3 + $0x10] sm:$0xff]
      %v1468 = vld [vmem:[%s3 + $0x18] sm:$0xff]
      %v1469 = vld [vmem:[%s3 + $0x20] sm:$0xff]
      %v1470 = vld [vmem:[%s3 + $0x28] sm:$0xff]
      %v1471 = vld [vmem:[%s3 + $0x30] sm:$0xff]
      %v1472 = vld [vmem:[%s3 + $0x38] sm:$0xff]
      %v1473 = vld [vmem:[%s3 + $0x40] sm:$0xff]
      %v1474 = vld [vmem:[%s3 + $0x48] sm:$0xff]
      %v1475 = vld [vmem:[%s3 + $0x50] sm:$0xff]
      %v1476 = vld [vmem:[%s3 + $0x58] sm:$0xff]
      %v1477 = vld [vmem:[%s3 + $0x60] sm:$0xff]
      %v1478 = vld [vmem:[%s3 + $0x68] sm:$0xff]
      %v1479 = vld [vmem:[%s3 + $0x70] sm:$0xff]
      %v1480 = vld [vmem:[%s3 + $0x78] sm:$0xff]
      %v1481 = vld [vmem:[%s3 + $0x80] sm:$0xff]
      %v1482 = vld [vmem:[%s3 + $0x88] sm:$0xff]
      %v1483 = vld [vmem:[%s3 + $0x90] sm:$0xff]
      %v1484 = vld [vmem:[%s3 + $0x98] sm:$0xff]
      %v1485 = vld [vmem:[%s3 + $0xa0] sm:$0xff]
      %v1486 = vld [vmem:[%s3 + $0xa8] sm:$0xff]
      %v1487 = vld [vmem:[%s3 + $0xb0] sm:$0xff]
      %v1488 = vld [vmem:[%s3 + $0xb8] sm:$0xff]
      %v1489 = vld [vmem:[%s3 + $0xc0] sm:$0xff]
      %v1490 = vld [vmem:[%s3 + $0xc8] sm:$0xff]
      %v1491 = vld [vmem:[%s3 + $0xd0] sm:$0xff]
      %v1492 = vld [vmem:[%s3 + $0xd8] sm:$0xff]
      %v1493 = vld [vmem:[%s3 + $0xe0] sm:$0xff]
      %v1494 = vld [vmem:[%s3 + $0xe8] sm:$0xff]
      %v1495 = vld [vmem:[%s3 + $0xf0] sm:$0xff]
      %v1496 = vld [vmem:[%s3 + $0xf8] sm:$0xff]
      %v1497 = vld [vmem:[#allocation3 + $0x8] sm:$0xff]
      %v1498 = vld [vmem:[#allocation3 + $0x18] sm:$0xff]
      %v1499 = vld [vmem:[#allocation3 + $0x28] sm:$0xff]
      %v1500 = vld [vmem:[#allocation3 + $0x38] sm:$0xff]
      %v1501 = vld [vmem:[#allocation3 + $0x48] sm:$0xff]
      %v1502 = vld [vmem:[#allocation3 + $0x58] sm:$0xff]
      %v1503 = vld [vmem:[#allocation3 + $0x68] sm:$0xff]
      %v1504 = vld [vmem:[#allocation3 + $0x78] sm:$0xff]
      %v1505 = vld [vmem:[#allocation3 + $0x88] sm:$0xff]
      %v1506 = vld [vmem:[#allocation3 + $0x98] sm:$0xff]
      %v1507 = vld [vmem:[#allocation3 + $0xa8] sm:$0xff]
      %v1508 = vld [vmem:[#allocation3 + $0xb8] sm:$0xff]
      %v1509 = vld [vmem:[#allocation3 + $0xc8] sm:$0xff]
      %v1510 = vld [vmem:[#allocation3 + $0xd8] sm:$0xff]
      %v1511 = vld [vmem:[#allocation3 + $0xe8] sm:$0xff]
      %v1512 = vld [vmem:[#allocation3 + $0xf8] sm:$0xff]
      %v1513 = vld [vmem:[#allocation3 + $0x108] sm:$0xff]
      %v1514 = vld [vmem:[#allocation3 + $0x118] sm:$0xff]
      %v1515 = vld [vmem:[#allocation3 + $0x128] sm:$0xff]
      %v1516 = vld [vmem:[#allocation3 + $0x138] sm:$0xff]
      %v1517 = vld [vmem:[#allocation3 + $0x148] sm:$0xff]
      %v1518 = vld [vmem:[#allocation3 + $0x158] sm:$0xff]
      %v1519 = vld [vmem:[#allocation3 + $0x168] sm:$0xff]
      %v1520 = vld [vmem:[#allocation3 + $0x178] sm:$0xff]
      %v1521 = vld [vmem:[#allocation3 + $0x188] sm:$0xff]
      %v1522 = vld [vmem:[#allocation3 + $0x198] sm:$0xff]
      %v1523 = vld [vmem:[#allocation3 + $0x1a8] sm:$0xff]
      %v1556 = vunpack.c.l.b16 %v1465
      %v1557 = vunpack.c.h.b16 %v1465
      %v1558 = vunpack.c.l.b16 %v1466
      %v1559 = vunpack.c.h.b16 %v1466
      %v1560 = vunpack.c.l.b16 %v1467
      %v1561 = vunpack.c.h.b16 %v1467
      %v1562 = vunpack.c.l.b16 %v1468
      %v1563 = vunpack.c.h.b16 %v1468
      %v1564 = vunpack.c.l.b16 %v1469
      %v1565 = vunpack.c.h.b16 %v1469
      %v1566 = vunpack.c.l.b16 %v1470
      %v1567 = vunpack.c.h.b16 %v1470
      %v1568 = vunpack.c.l.b16 %v1471
      %v1569 = vunpack.c.h.b16 %v1471
      %v1570 = vunpack.c.l.b16 %v1472
      %v1571 = vunpack.c.h.b16 %v1472
      %v1572 = vunpack.c.l.b16 %v1473
      %v1573 = vunpack.c.h.b16 %v1473
      %v1574 = vunpack.c.l.b16 %v1474
      %v1575 = vunpack.c.h.b16 %v1474
      %v1576 = vunpack.c.l.b16 %v1475
      %v1577 = vunpack.c.h.b16 %v1475
      %v1578 = vunpack.c.l.b16 %v1476
      %v1579 = vunpack.c.h.b16 %v1476
      %v1580 = vunpack.c.l.b16 %v1477
      %v1581 = vunpack.c.h.b16 %v1477
      %v1582 = vunpack.c.l.b16 %v1478
      %v1583 = vunpack.c.h.b16 %v1478
      %v1584 = vunpack.c.l.b16 %v1479
      %v1585 = vunpack.c.h.b16 %v1479
      %v1586 = vunpack.c.l.b16 %v1480
      %v1587 = vunpack.c.h.b16 %v1480
      %v1588 = vunpack.c.l.b16 %v1481
      %v1589 = vunpack.c.h.b16 %v1481
      %v1590 = vunpack.c.l.b16 %v1482
      %v1591 = vunpack.c.h.b16 %v1482
      %v1592 = vunpack.c.l.b16 %v1483
      %v1593 = vunpack.c.h.b16 %v1483
      %v1594 = vunpack.c.l.b16 %v1484
      %v1595 = vunpack.c.h.b16 %v1484
      %v1596 = vunpack.c.l.b16 %v1485
      %v1597 = vunpack.c.h.b16 %v1485
      %v1598 = vunpack.c.l.b16 %v1486
      %v1599 = vunpack.c.h.b16 %v1486
      %v1600 = vunpack.c.l.b16 %v1487
      %v1601 = vunpack.c.h.b16 %v1487
      %v1602 = vunpack.c.l.b16 %v1488
      %v1603 = vunpack.c.h.b16 %v1488
      %v1604 = vunpack.c.l.b16 %v1489
      %v1605 = vunpack.c.h.b16 %v1489
      %v1606 = vunpack.c.l.b16 %v1490
      %v1607 = vunpack.c.h.b16 %v1490
      %v1608 = vunpack.c.l.b16 %v1491
      %v1609 = vunpack.c.h.b16 %v1491
      %v1610 = vunpack.c.l.b16 %v1492
      %v1611 = vunpack.c.h.b16 %v1492
      %v1612 = vunpack.c.l.b16 %v1493
      %v1613 = vunpack.c.h.b16 %v1493
      %v1614 = vunpack.c.l.b16 %v1494
      %v1615 = vunpack.c.h.b16 %v1494
      %v1616 = vunpack.c.l.b16 %v1495
      %v1617 = vunpack.c.h.b16 %v1495
      %v1618 = vunpack.c.l.b16 %v1496
      %v1619 = vunpack.c.h.b16 %v1496
      %v1620 = vpack.c.b16 %v1560, %v1556
      %v1621 = vpack.c.b16 %v1561, %v1557
      %v1622 = vpack.c.b16 %v1562, %v1558
      %v1623 = vpack.c.b16 %v1563, %v1559
      %v1624 = vpack.c.b16 %v1568, %v1564
      %v1625 = vpack.c.b16 %v1569, %v1565
      %v1626 = vpack.c.b16 %v1570, %v1566
      %v1627 = vpack.c.b16 %v1571, %v1567
      %v1628 = vpack.c.b16 %v1576, %v1572
      %v1629 = vpack.c.b16 %v1577, %v1573
      %v1630 = vpack.c.b16 %v1578, %v1574
      %v1631 = vpack.c.b16 %v1579, %v1575
      %v1632 = vpack.c.b16 %v1584, %v1580
      %v1633 = vpack.c.b16 %v1585, %v1581
      %v1634 = vpack.c.b16 %v1586, %v1582
      %v1635 = vpack.c.b16 %v1587, %v1583
      %v1636 = vpack.c.b16 %v1592, %v1588
      %v1637 = vpack.c.b16 %v1593, %v1589
      %v1638 = vpack.c.b16 %v1594, %v1590
      %v1639 = vpack.c.b16 %v1595, %v1591
      %v1640 = vpack.c.b16 %v1600, %v1596
      %v1641 = vpack.c.b16 %v1601, %v1597
      %v1642 = vpack.c.b16 %v1602, %v1598
      %v1643 = vpack.c.b16 %v1603, %v1599
      %v1644 = vpack.c.b16 %v1608, %v1604
      %v1645 = vpack.c.b16 %v1609, %v1605
      %v1646 = vpack.c.b16 %v1610, %v1606
      %v1647 = vpack.c.b16 %v1611, %v1607
      %v1648 = vpack.c.b16 %v1616, %v1612
      %v1649 = vpack.c.b16 %v1617, %v1613
      %v1650 = vpack.c.b16 %v1618, %v1614
      %v1651 = vpack.c.b16 %v1619, %v1615
      %v1677 = vsel %vm1162, %v1623, 0
      %v1680 = vsel %vm1162, %v1627, 0
      %v1683 = vsel %vm1162, %v1631, 0
      %v1686 = vsel %vm1162, %v1635, 0
      %v1689 = vsel %vm1162, %v1639, 0
      %v1692 = vsel %vm1162, %v1643, 0
      %v1695 = vsel %vm1162, %v1647, 0
      %v1698 = vsel %vm1162, %v1651, 0
      %1700 = vmatprep.subr.bf16.mxu0 0
      %1701 = vmatpush1.bf16.msra.mxu0 %v1497
      %1702 = vmatprep.subr.bf16.mxu0 0
      %1703 = vmatpush1.bf16.msra.mxu0 %v1498
      %1704 = vmatprep.subr.bf16.mxu0 0
      %1705 = vmatpush1.bf16.msra.mxu0 %v1499
      %1706 = vmatprep.subr.bf16.mxu0 0
      %1707 = vmatpush1.bf16.msra.mxu0 %v1500
      %1708 = vmatprep.subr.bf16.mxu0 0
      %1709 = vmatpush1.bf16.msra.mxu0 %v1501
      %1710 = vmatprep.subr.bf16.mxu0 0
      %1711 = vmatpush1.bf16.msra.mxu0 %v1502
      %1712 = vmatprep.subr.bf16.mxu0 0
      %1713 = vmatpush1.bf16.msra.mxu0 %v1503
      %1714 = vmatprep.subr.bf16.mxu0 0
      %1715 = vmatpush1.bf16.msra.mxu0 %v1504
      %1716 = vmatprep.subr.bf16.mxu0 0
      %1717 = vmatpush1.bf16.msra.mxu0 %v1505
      %1718 = vmatprep.subr.bf16.mxu0 0
      %1719 = vmatpush1.bf16.msra.mxu0 %v1506
      %1720 = vmatprep.subr.bf16.mxu0 0
      %1721 = vmatpush1.bf16.msra.mxu0 %v1507
      %1722 = vmatprep.subr.bf16.mxu0 0
      %1723 = vmatpush1.bf16.msra.mxu0 %v1508
      %1724 = vmatprep.subr.bf16.mxu0 0
      %1725 = vmatpush1.bf16.msra.mxu0 %v1509
      %1726 = vmatprep.subr.bf16.mxu0 0
      %1727 = vmatpush1.bf16.msra.mxu0 %v1510
      %1728 = vmatprep.subr.bf16.mxu0 0
      %1729 = vmatpush1.bf16.msra.mxu0 %v1511
      %1730 = vmatprep.subr.bf16.mxu0 0
      %1731 = vmatpush1.bf16.msra.mxu0 %v1512
      %1732 = vmatprep.mubr.bf16.mxu0 %v1621
      %1733 = vmatmul.mubr.bf16.gmra.mrb[0].mxu0 %v1620
      %v1734 = vpop.f32.mrb[0].mxu0
      %v1735 = vadd.f32 0.0, %v1734
      %v1736 = vpop.f32.mrb[0].mxu0
      %v1737 = vpop.f32.mrb[0].mxu0
      %v1738 = vadd.f32 0.0, %v1737
      %v1739 = vpop.f32.mrb[0].mxu0
      %1740 = vmatprep.mubr.bf16.mxu0 %v1625
      %1741 = vmatmul.mubr.bf16.gmra.mrb[0].mxu0 %v1624
      %v1742 = vpop.f32.mrb[0].mxu0
      %v1743 = vadd.f32 0.0, %v1742
      %v1744 = vpop.f32.mrb[0].mxu0
      %v1745 = vpop.f32.mrb[0].mxu0
      %v1746 = vadd.f32 0.0, %v1745
      %v1747 = vpop.f32.mrb[0].mxu0
      %1748 = vmatprep.mubr.bf16.mxu0 %v1629
      %1749 = vmatmul.mubr.bf16.gmra.mrb[0].mxu0 %v1628
      %v1750 = vpop.f32.mrb[0].mxu0
      %v1751 = vadd.f32 0.0, %v1750
      %v1752 = vpop.f32.mrb[0].mxu0
      %v1753 = vpop.f32.mrb[0].mxu0
      %v1754 = vadd.f32 0.0, %v1753
      %v1755 = vpop.f32.mrb[0].mxu0
      %1756 = vmatprep.mubr.bf16.mxu0 %v1633
      %1757 = vmatmul.mubr.bf16.gmra.mrb[0].mxu0 %v1632
      %v1758 = vpop.f32.mrb[0].mxu0
      %v1759 = vadd.f32 0.0, %v1758
      %v1760 = vpop.f32.mrb[0].mxu0
      %v1761 = vpop.f32.mrb[0].mxu0
      %v1762 = vadd.f32 0.0, %v1761
      %v1763 = vpop.f32.mrb[0].mxu0
      %1764 = vmatprep.mubr.bf16.mxu0 %v1637
      %1765 = vmatmul.mubr.bf16.gmra.mrb[0].mxu0 %v1636
      %v1766 = vpop.f32.mrb[0].mxu0
      %v1767 = vadd.f32 0.0, %v1766
      %v1768 = vpop.f32.mrb[0].mxu0
      %v1769 = vpop.f32.mrb[0].mxu0
      %v1770 = vadd.f32 0.0, %v1769
      %v1771 = vpop.f32.mrb[0].mxu0
      %1772 = vmatprep.mubr.bf16.mxu0 %v1641
      %1773 = vmatmul.mubr.bf16.gmra.mrb[0].mxu0 %v1640
      %v1774 = vpop.f32.mrb[0].mxu0
      %v1775 = vadd.f32 0.0, %v1774
      %v1776 = vpop.f32.mrb[0].mxu0
      %v1777 = vpop.f32.mrb[0].mxu0
      %v1778 = vadd.f32 0.0, %v1777
      %v1779 = vpop.f32.mrb[0].mxu0
      %1780 = vmatprep.mubr.bf16.mxu0 %v1645
      %1781 = vmatmul.mubr.bf16.gmra.mrb[0].mxu0 %v1644
      %v1782 = vpop.f32.mrb[0].mxu0
      %v1783 = vadd.f32 0.0, %v1782
      %v1784 = vpop.f32.mrb[0].mxu0
      %v1785 = vpop.f32.mrb[0].mxu0
      %v1786 = vadd.f32 0.0, %v1785
      %v1787 = vpop.f32.mrb[0].mxu0
      %1788 = vmatprep.mubr.bf16.mxu0 %v1649
      %1789 = vmatmul.mubr.bf16.gmra.mrb[0].mxu0 %v1648
      %v1790 = vpop.f32.mrb[0].mxu0
      %v1791 = vadd.f32 0.0, %v1790
      %v1792 = vpop.f32.mrb[0].mxu0
      %v1793 = vpop.f32.mrb[0].mxu0
      %v1794 = vadd.f32 0.0, %v1793
      %v1795 = vpop.f32.mrb[0].mxu0
      %1796 = vdwg.mxu0
      %1797 = vmatprep.subr.bf16.mxu0 0
      %1798 = vmatpush1.bf16.msra.mxu0 %v1513
      %1799 = vmatprep.subr.bf16.mxu0 0
      %1800 = vmatpush1.bf16.msra.mxu0 %v1514
      %1801 = vmatprep.subr.bf16.mxu0 0
      %1802 = vmatpush1.bf16.msra.mxu0 %v1515
      %1803 = vmatprep.subr.bf16.mxu0 0
      %1804 = vmatpush1.bf16.msra.mxu0 %v1516
      %1805 = vmatprep.subr.bf16.mxu0 0
      %1806 = vmatpush1.bf16.msra.mxu0 %v1517
      %1807 = vmatprep.subr.bf16.mxu0 0
      %1808 = vmatpush1.bf16.msra.mxu0 %v1518
      %1809 = vmatprep.subr.bf16.mxu0 0
      %1810 = vmatpush1.bf16.msra.mxu0 %v1519
      %1811 = vmatprep.subr.bf16.mxu0 0
      %1812 = vmatpush1.bf16.msra.mxu0 %v1520
      %1813 = vmatprep.subr.bf16.mxu0 0
      %1814 = vmatpush1.bf16.msra.mxu0 %v1521
      %1815 = vmatprep.subr.bf16.mxu0 0
      %1816 = vmatpush1.bf16.msra.mxu0 %v1522
      %1817 = vmatprep.subr.bf16.mxu0 0
      %1818 = vmatpush1.bf16.msra.mxu0 %v1523
      %1819 = vmatprep.subr.bf16.mxu0 0
      %1820 = vmatpush1.bf16.msra.mxu0 0
      %1821 = vmatprep.subr.bf16.mxu0 0
      %1822 = vmatpush1.bf16.msra.mxu0 0
      %1823 = vmatprep.subr.bf16.mxu0 0
      %1824 = vmatpush1.bf16.msra.mxu0 0
      %1825 = vmatprep.subr.bf16.mxu0 0
      %1826 = vmatpush1.bf16.msra.mxu0 0
      %1827 = vmatprep.subr.bf16.mxu0 0
      %1828 = vmatpush1.bf16.msra.mxu0 0
      %1829 = vmatprep.mubr.bf16.mxu0 %v1677
      %1830 = vmatmul.mubr.bf16.gmra.mrb[0].mxu0 %v1622
      %v1831 = vpop.f32.mrb[0].mxu0
      %v1832 = vadd.f32 %v1735, %v1831
      %v1833 = vpop.f32.mrb[0].mxu0
      %v1834 = vpop.f32.mrb[0].mxu0
      %v1835 = vadd.f32 %v1738, %v1834
      %v1836 = vpop.f32.mrb[0].mxu0
      %1837 = vmatprep.mubr.bf16.mxu0 %v1680
      %1838 = vmatmul.mubr.bf16.gmra.mrb[0].mxu0 %v1626
      %v1839 = vpop.f32.mrb[0].mxu0
      %v1840 = vadd.f32 %v1743, %v1839
      %v1841 = vpop.f32.mrb[0].mxu0
      %v1842 = vpop.f32.mrb[0].mxu0
      %v1843 = vadd.f32 %v1746, %v1842
      %v1844 = vpop.f32.mrb[0].mxu0
      %1845 = vmatprep.mubr.bf16.mxu0 %v1683
      %1846 = vmatmul.mubr.bf16.gmra.mrb[0].mxu0 %v1630
      %v1847 = vpop.f32.mrb[0].mxu0
      %v1848 = vadd.f32 %v1751, %v1847
      %v1849 = vpop.f32.mrb[0].mxu0
      %v1850 = vpop.f32.mrb[0].mxu0
      %v1851 = vadd.f32 %v1754, %v1850
      %v1852 = vpop.f32.mrb[0].mxu0
      %1853 = vmatprep.mubr.bf16.mxu0 %v1686
      %1854 = vmatmul.mubr.bf16.gmra.mrb[0].mxu0 %v1634
      %v1855 = vpop.f32.mrb[0].mxu0
      %v1856 = vadd.f32 %v1759, %v1855
      %v1857 = vpop.f32.mrb[0].mxu0
      %v1858 = vpop.f32.mrb[0].mxu0
      %v1859 = vadd.f32 %v1762, %v1858
      %v1860 = vpop.f32.mrb[0].mxu0
      %1861 = vmatprep.mubr.bf16.mxu0 %v1689
      %1862 = vmatmul.mubr.bf16.gmra.mrb[0].mxu0 %v1638
      %v1863 = vpop.f32.mrb[0].mxu0
      %v1864 = vadd.f32 %v1767, %v1863
      %v1865 = vpop.f32.mrb[0].mxu0
      %v1866 = vpop.f32.mrb[0].mxu0
      %v1867 = vadd.f32 %v1770, %v1866
      %v1868 = vpop.f32.mrb[0].mxu0
      %1869 = vmatprep.mubr.bf16.mxu0 %v1692
      %1870 = vmatmul.mubr.bf16.gmra.mrb[0].mxu0 %v1642
      %v1871 = vpop.f32.mrb[0].mxu0
      %v1872 = vadd.f32 %v1775, %v1871
      %v1873 = vpop.f32.mrb[0].mxu0
      %v1874 = vpop.f32.mrb[0].mxu0
      %v1875 = vadd.f32 %v1778, %v1874
      %v1876 = vpop.f32.mrb[0].mxu0
      %1877 = vmatprep.mubr.bf16.mxu0 %v1695
      %1878 = vmatmul.mubr.bf16.gmra.mrb[0].mxu0 %v1646
      %v1879 = vpop.f32.mrb[0].mxu0
      %v1880 = vadd.f32 %v1783, %v1879
      %v1881 = vpop.f32.mrb[0].mxu0
      %v1882 = vpop.f32.mrb[0].mxu0
      %v1883 = vadd.f32 %v1786, %v1882
      %v1884 = vpop.f32.mrb[0].mxu0
      %1885 = vmatprep.mubr.bf16.mxu0 %v1698
      %1886 = vmatmul.mubr.bf16.gmra.mrb[0].mxu0 %v1650
      %v1887 = vpop.f32.mrb[0].mxu0
      %v1888 = vadd.f32 %v1791, %v1887
      %v1889 = vpop.f32.mrb[0].mxu0
      %v1890 = vpop.f32.mrb[0].mxu0
      %v1891 = vadd.f32 %v1794, %v1890
      %v1892 = vpop.f32.mrb[0].mxu0
      %1893 = vdwg.mxu0
      %v1894 = vmul.f32 %v1832, 0.5
      %v1895 = vmul.f32 %v1835, 0.5
      %v1896 = vmul.f32 %v1840, 0.5
      %v1897 = vmul.f32 %v1843, 0.5
      %v1898 = vtanh.pop %v1894
      %v1899 = vtanh.pop %v1895
      %v1900 = vtanh.pop %v1896
      %v1901 = vtanh.pop %v1897
      %v1902 = vmul.f32 %v1898, 0.5
      %v1903 = vmul.f32 %v1899, 0.5
      %v1904 = vmul.f32 %v1900, 0.5
      %v1905 = vmul.f32 %v1901, 0.5
      %v1906 = vadd.f32 %v1902, 0.5
      %v1907 = vadd.f32 %v1903, 0.5
      %v1908 = vadd.f32 %v1904, 0.5
      %v1909 = vadd.f32 %v1905, 0.5
      %v1910 = vmul.f32 %v1848, 0.5
      %v1911 = vmul.f32 %v1851, 0.5
      %v1912 = vmul.f32 %v1856, 0.5
      %v1913 = vmul.f32 %v1859, 0.5
      %v1914 = vtanh.pop %v1910
      %v1915 = vtanh.pop %v1911
      %v1916 = vtanh.pop %v1912
      %v1917 = vtanh.pop %v1913
      %v1918 = vmul.f32 %v1914, 0.5
      %v1919 = vmul.f32 %v1915, 0.5
      %v1920 = vmul.f32 %v1916, 0.5
      %v1921 = vmul.f32 %v1917, 0.5
      %v1922 = vadd.f32 %v1918, 0.5
      %v1923 = vadd.f32 %v1919, 0.5
      %v1924 = vadd.f32 %v1920, 0.5
      %v1925 = vadd.f32 %v1921, 0.5
      %v1926 = vmul.f32 %v1864, 0.5
      %v1927 = vmul.f32 %v1867, 0.5
      %v1928 = vmul.f32 %v1872, 0.5
      %v1929 = vmul.f32 %v1875, 0.5
      %v1930 = vtanh.pop %v1926
      %v1931 = vtanh.pop %v1927
      %v1932 = vtanh.pop %v1928
      %v1933 = vtanh.pop %v1929
      %v1934 = vmul.f32 %v1930, 0.5
      %v1935 = vmul.f32 %v1931, 0.5
      %v1936 = vmul.f32 %v1932, 0.5
      %v1937 = vmul.f32 %v1933, 0.5
      %v1938 = vadd.f32 %v1934, 0.5
      %v1939 = vadd.f32 %v1935, 0.5
      %v1940 = vadd.f32 %v1936, 0.5
      %v1941 = vadd.f32 %v1937, 0.5
      %v1942 = vtanh.pop %v1880
      %v1943 = vtanh.pop %v1883
      %v1944 = vtanh.pop %v1888
      %v1945 = vtanh.pop %v1891
      %v1946 = vld [vmem:[%s267 + $0x8] sm:$0xff]
      %v1947 = vld [vmem:[%s267 + $0x18] sm:$0xff]
      %v1948 = vld [vmem:[%s267 + $0x28] sm:$0xff]
      %v1949 = vld [vmem:[%s267 + $0x38] sm:$0xff]
      %v1950 = vmul.f32 %v1922, %v1946
      %v1951 = vmul.f32 %v1923, %v1947
      %v1952 = vmul.f32 %v1924, %v1948
      %v1953 = vmul.f32 %v1925, %v1949
      %v1954 = vmul.f32 %v1906, %v1942
      %v1955 = vmul.f32 %v1907, %v1943
      %v1956 = vmul.f32 %v1908, %v1944
      %v1957 = vmul.f32 %v1909, %v1945
      %v1958 = vadd.f32 %v1950, %v1954
      %v1959 = vadd.f32 %v1951, %v1955
      %v1960 = vadd.f32 %v1952, %v1956
      %v1961 = vadd.f32 %v1953, %v1957
      %v1962 = vtanh.pop %v1958
      %v1963 = vtanh.pop %v1959
      %v1964 = vtanh.pop %v1960
      %v1965 = vtanh.pop %v1961
      %v1966 = vmul.f32 %v1938, %v1962
      %v1967 = vmul.f32 %v1939, %v1963
      %v1968 = vmul.f32 %v1940, %v1964
      %v1969 = vmul.f32 %v1941, %v1965
      %1970 = vst [vmem:[%s277 + $0x8] sm:$0xff] %v1958
      %1971 = vst [vmem:[%s277 + $0x18] sm:$0xff] %v1959
      %1972 = vst [vmem:[%s277 + $0x28] sm:$0xff] %v1960
      %1973 = vst [vmem:[%s277 + $0x38] sm:$0xff] %v1961
      %1974 = vst [vmem:[%s272 + $0x8] sm:$0xff] %v1966
      %1975 = vst [vmem:[%s272 + $0x18] sm:$0xff] %v1967
      %1976 = vst [vmem:[%s272 + $0x28] sm:$0xff] %v1968
      %1977 = vst [vmem:[%s272 + $0x38] sm:$0xff] %v1969
      %p1978 = scmp.lt.s32.totalorder %s17, 1
      %s1979 = scalar_select %p1978, %s17, 1
      %s1980 = smul.addr %s1979, 8
      %s1981 = smul.addr %s1980, 8
      %s1982 = scalar_lea.vmem %s4, %s1981
      %p1983 = scmp.lt.s32.totalorder %s17, 1
      %s1984 = scalar_select %p1983, %s17, 1
      %s1985 = smul.addr %s1984, 8
      %s1986 = smul.addr %s1985, 8
      %s1987 = scalar_lea.vmem %s5, %s1986
      // Predicated region
      $region37: #{conv_lstm_cell.1} parent=35 // pred_check
        %p1988 = pneg %p134
      $region38: #{conv_lstm_cell.1} parent=35 // pred_check_branch
        %1990 = sbr.rel (%p1988) target = $region40
      $region39: #{conv_lstm_cell.1} parent=35 // pred_region
        _
      $region40: #{conv_lstm_cell.1} parent=35 // pred_fallthru
        _
      // Predicated region
      $region41: #{conv_lstm_cell.1} parent=35 // pred_check
        %p1991 = pneg %p160
      $region42: #{conv_lstm_cell.1} parent=35 // pred_check_branch
        %1993 = sbr.rel (%p1991) target = $region44
      $region43: #{conv_lstm_cell.1} parent=35 // pred_region
        _
      $region44: #{conv_lstm_cell.1} parent=35 // pred_fallthru
        _
    $region36: #{conv_lstm_cell.1} parent=5 // pred_fallthru
      _
    %p1994 = scmp.le.s32.totalorder 2, %s12
    // Predicated region
    $region45: #{conv_lstm_cell.1} parent=5 // pred_check
      %p1995 = pneg %p1994
    $region46: #{conv_lstm_cell.1} parent=5 // pred_check_branch
      %1997 = sbr.rel (%p1995) target = $region48
    $region47: #{conv_lstm_cell.1} parent=5 // pred_region
      %s1998 = ssub.s32 %s12, 2
      // Predicated region
      $region49: #{conv_lstm_cell.1} parent=47 // pred_check
        %p1999 = pneg %p140
      $region50: #{conv_lstm_cell.1} parent=47 // pred_check_branch
        %2001 = sbr.rel (%p1999) target = $region52
      $region51: #{conv_lstm_cell.1} parent=47 // pred_region
        %p2002 = scmp.lt.s32.totalorder %s18, 1
        %s2003 = scalar_select %p2002, %s18, 1
        %s2004 = smul.addr %s2003, 8
        %s2005 = smul.addr %s2004, 8
        %s2006 = scalar_lea.vmem %s4, %s2005
      $region52: #{conv_lstm_cell.1} parent=47 // pred_fallthru
        _
      // Predicated region
      $region53: #{conv_lstm_cell.1} parent=47 // pred_check
        %p2007 = pneg %p166
      $region54: #{conv_lstm_cell.1} parent=47 // pred_check_branch
        %2009 = sbr.rel (%p2007) target = $region56
      $region55: #{conv_lstm_cell.1} parent=47 // pred_region
        %p2010 = scmp.lt.s32.totalorder %s18, 1
        %s2011 = scalar_select %p2010, %s18, 1
        %s2012 = smul.addr %s2011, 8
        %s2013 = smul.addr %s2012, 8
        %s2014 = scalar_lea.vmem %s5, %s2013
      $region56: #{conv_lstm_cell.1} parent=47 // pred_fallthru
        _
    $region48: #{conv_lstm_cell.1} parent=5 // pred_fallthru
      _
  $region6: #{conv_lstm_cell.1} parent=0 // loop_footer
    %s16 = sadd.s32 1, %s12
  $region7: #{conv_lstm_cell.1} parent=0 // loop_footer_branch
    %11 = sbr.rel target = $region3
  $region8: #{conv_lstm_cell.1} parent=0 // loop_exit
    _

</llo_original>
